<compile_context>
chip_gen: v5e
topology: v5e:2x2
jax: 0.10.0
libtpu: 0.0.40
codegen_flags: <defaults>
</compile_context>

<pallas_src>
from functools import partial

import jax
import jax.numpy as jnp
from jax.experimental import pallas as pl
from jax.experimental.pallas import tpu as pltpu

B = 2      # batch
L = 300    # sequence length

# conv / pool geometry
K1, K2, K3 = 3, 4, 4
C1, C2, C3 = 5, 10, 20
L1 = L - K1 + 1        # 298  conv1 out
P1 = L1 // 2           # 149  pool1 out
L2 = P1 - K2 + 1       # 146  conv2 out
P2 = L2 // 2           # 73   pool2 out
L3 = P2 - K3 + 1       # 70   conv3 out
P3 = L3 // 2           # 35   pool3 out
NCLS = 5
assert C3 * P3 == 700


# ----------------------------------------------------------------------------------
# Fused Pallas kernel: conv/relu/pool stack + folded FC head, whole batch at once.
# ----------------------------------------------------------------------------------
def fused_kernel(x_ref, w1_ref, b1_ref, w2_ref, b2_ref, w3_ref, b3_ref,
                 wf_ref, r_ref, bf_ref, o_ref, s1, s2, s3, *, batch):
    # ---- conv1 (1->5, k=3) + relu: im2col patches from shifted sublane reads ----
    p = jnp.concatenate([x_ref[pl.ds(k, L1), :] for k in range(K1)], axis=1)   # (298, 3*B)
    s1[...] = jnp.maximum(
        jnp.dot(p, w1_ref[...], preferred_element_type=jnp.float32) + b1_ref[...], 0.0)
    # ---- maxpool1 (2,2): elementwise max of even/odd rows (sublane-strided reads) ----
    h = jnp.maximum(s1[pl.ds(0, P1, stride=2), :], s1[pl.ds(1, P1, stride=2), :])  # (149, 5B)

    # ---- conv2 (5->10, k=4) + relu ----
    p = jnp.concatenate([h[k:k + L2, :] for k in range(K2)], axis=1)           # (146, 20*B)
    s2[...] = jnp.maximum(
        jnp.dot(p, w2_ref[...], preferred_element_type=jnp.float32) + b2_ref[...], 0.0)
    h = jnp.maximum(s2[pl.ds(0, P2, stride=2), :], s2[pl.ds(1, P2, stride=2), :])  # (73, 10B)

    # ---- conv3 (10->20, k=4), NO relu ----
    p = jnp.concatenate([h[k:k + L3, :] for k in range(K3)], axis=1)           # (70, 40*B)
    s3[...] = jnp.dot(p, w3_ref[...], preferred_element_type=jnp.float32) + b3_ref[...]
    f = jnp.maximum(s3[pl.ds(0, P3, stride=2), :], s3[pl.ds(1, P3, stride=2), :])  # (35, 20B)
    # f[p, c*B + b] = feature (sample b, channel c, position p)

    # ---- folded fc head (700 -> 5 affine; flatten order folded into wf_ref) ----
    ft = jnp.concatenate([f] * NCLS, axis=1)                   # (35, 5*20*B)
    srow = jnp.sum(ft * wf_ref[...], axis=0, keepdims=True)    # (1, 5*20*B)
    # TODO(synk): nn.Dropout(0.2) is identity in eval mode; no train-mode RNG dropout applied.
    rows = [jnp.dot(srow, r_ref[b], preferred_element_type=jnp.float32) + bf_ref[...]
            for b in range(batch)]                             # each (1, 5)
    o_ref[...] = jnp.concatenate(rows, axis=0)                 # (B, 5)


def _fused_call(x_lb, prepped):
    (w1b, b1b, w2b, b2b, w3b, b3b, wcat, rsel, bf) = prepped
    batch = x_lb.shape[1]
    vmem = pl.BlockSpec(memory_space=pltpu.MemorySpace.VMEM)
    return pl.pallas_call(
        partial(fused_kernel, batch=batch),
        out_shape=jax.ShapeDtypeStruct((batch, NCLS), jnp.float32),
        in_specs=[vmem] * 10,
        out_specs=vmem,
        scratch_shapes=[
            pltpu.VMEM((L1, C1 * batch), jnp.float32),   # conv1 output (pre-pool)
            pltpu.VMEM((L2, C2 * batch), jnp.float32),   # conv2 output (pre-pool)
            pltpu.VMEM((L3, C3 * batch), jnp.float32),   # conv3 output (pre-pool)
        ],
    )(x_lb, w1b, b1b, w2b, b2b, w3b, b3b, wcat, rsel, bf)


@jax.jit
def classification_forward(x, prepped):
    # PyTorch's x.permute(0,2,1) glue: present the single input channel position-major
    # with batch on lanes -> (L, B).
    x_lb = jnp.transpose(x[:, :, 0], (1, 0))
    return _fused_call(x_lb, prepped)


# ----------------------------------------------------------------------------------
# One-time parameter preprocessing (all weight re-layout lives here, not in the hot path)
# ----------------------------------------------------------------------------------
def prepare_params(params, batch=B):
    (w1, b1, w2, b2, w3, b3, fw1, fb1, fw2, fb2, fw3, fb3) = params
    f32 = jnp.float32

    def conv_block(w, b):
        o, c, k = w.shape
        m = jnp.transpose(w, (2, 1, 0)).reshape(k * c, o)            # row = kk*c + cc
        wblk = jnp.kron(m, jnp.eye(batch, dtype=f32)).astype(f32)    # (k*c*B, o*B) block-diag
        bblk = jnp.repeat(b, batch)[None, :].astype(f32)             # (1, o*B), lane = o*B + b
        return wblk, bblk

    w1b, b1b = conv_block(w1, b1)
    w2b, b2b = conv_block(w2, b2)
    w3b, b3b = conv_block(w3, b3)

    # Fold fc1 -> (dropout=id) -> fc2 -> (dropout=id) -> fc3 into one affine 700->5 map.
    wfold = fw1.T @ fw2.T @ fw3.T                                    # (700, 5)
    bfold = fb1 @ fw2.T @ fw3.T + fb2 @ fw3.T + fb3                  # (5,)

    # Rearrange for the in-kernel tile-multiply-reduce: lane = j*(20*B) + c*B + b.
    wr = wfold.reshape(C3, P3, NCLS)                                 # [c, p, j]
    wcat = jnp.transpose(wr, (1, 2, 0))[:, :, :, None]               # (35, 5, 20, 1)
    wcat = jnp.broadcast_to(wcat, (P3, NCLS, C3, batch)).reshape(P3, NCLS * C3 * batch)

    # Per-sample block-sum selectors: rsel[b, j*(20*B)+c*B+b', j'] = (j==j') & (b==b').
    lanes = jnp.arange(NCLS * C3 * batch)
    j_of = lanes // (C3 * batch)
    b_of = lanes % batch
    rsel = ((j_of[None, :, None] == jnp.arange(NCLS)[None, None, :]) &
            (b_of[None, :, None] == jnp.arange(batch)[:, None, None])).astype(f32)

    return (w1b, b1b, w2b, b2b, w3b, b3b,
            wcat.astype(f32), rsel, bfold[None, :].astype(f32))


# ----------------------------------------------------------------------------------
# Pure-JAX reference (unfolded, mirrors the PyTorch module) for correctness check
# ----------------------------------------------------------------------------------
def ref_forward(x, params):
    (w1, b1, w2, b2, w3, b3, fw1, fb1, fw2, fb2, fw3, fb3) = params

    def conv(h, w, b):
        y = jax.lax.conv_general_dilated(h, w, (1,), "VALID",
                                         dimension_numbers=("NCH", "OIH", "NCH"))
        return y + b[None, :, None]

    def pool(h):
        bn, c, ln = h.shape
        p = ln // 2
        return h[:, :, :2 * p].reshape(bn, c, p, 2).max(axis=-1)

    h = jnp.transpose(x, (0, 2, 1))
    h = pool(jax.nn.relu(conv(h, w1, b1)))
    h = pool(jax.nn.relu(conv(h, w2, b2)))
    h = pool(conv(h, w3, b3))
    xf = h.reshape(x.shape[0], 20 * 35)
    y = xf @ fw1.T + fb1
    y = y @ fw2.T + fb2
    y = y @ fw3.T + fb3
    return y


# ----------------------------------------------------------------------------------
def init_params(key):
    def u(k, shape, fan_in):
        bound = 1.0 / jnp.sqrt(float(fan_in))
        return jax.random.uniform(k, shape, jnp.float32, -bound, bound)

    ks = jax.random.split(key, 12)
    w1 = u(ks[0], (5, 1, 3), 1 * 3);    b1 = u(ks[1], (5,), 1 * 3)
    w2 = u(ks[2], (10, 5, 4), 5 * 4);   b2 = u(ks[3], (10,), 5 * 4)
    w3 = u(ks[4], (20, 10, 4), 10 * 4); b3 = u(ks[5], (20,), 10 * 4)
    fw1 = u(ks[6], (30, 700), 700);     fb1 = u(ks[7], (30,), 700)
    fw2 = u(ks[8], (20, 30), 30);       fb2 = u(ks[9], (20,), 30)
    fw3 = u(ks[10], (5, 20), 20);       fb3 = u(ks[11], (5,), 20)
    return (w1, b1, w2, b2, w3, b3, fw1, fb1, fw2, fb2, fw3, fb3)


if __name__ == "__main__":
    key = jax.random.PRNGKey(0)
    kx, kp = jax.random.split(key)
    x = jax.random.normal(kx, (B, L, 1), dtype=jnp.float32)
    params = init_params(kp)
    prepped = prepare_params(params, batch=B)   # one-time weight re-layout (not in hot path)

    out = classification_forward(x, prepped)
    out = jax.block_until_ready(out)
    assert out.shape == (B, 5), out.shape

    ref = ref_forward(x, params)
    assert jnp.all(jnp.isfinite(out))
    assert jnp.allclose(out, ref, rtol=2e-3, atol=2e-3), (out, ref)

    print("KERNEL_OK")
</pallas_src>

<mosaic_0001>
module attributes {stable_mosaic.version = 11 : i64} {
  func.func @fused_kernel(%arg0: memref<300x2xf32, #tpu.memory_space<vmem>>, %arg1: memref<6x10xf32, #tpu.memory_space<vmem>>, %arg2: memref<1x10xf32, #tpu.memory_space<vmem>>, %arg3: memref<40x20xf32, #tpu.memory_space<vmem>>, %arg4: memref<1x20xf32, #tpu.memory_space<vmem>>, %arg5: memref<80x40xf32, #tpu.memory_space<vmem>>, %arg6: memref<1x40xf32, #tpu.memory_space<vmem>>, %arg7: memref<35x200xf32, #tpu.memory_space<vmem>>, %arg8: memref<2x200x5xf32, #tpu.memory_space<vmem>>, %arg9: memref<1x5xf32, #tpu.memory_space<vmem>>, %arg10: memref<2x5xf32, #tpu.memory_space<vmem>>, %arg11: memref<298x10xf32, #tpu.memory_space<vmem>>, %arg12: memref<146x20xf32, #tpu.memory_space<vmem>>, %arg13: memref<70x40xf32, #tpu.memory_space<vmem>>) attributes {dimension_semantics = [], scalar_prefetch = 0 : i64, scratch_operands = 3 : i64, tpu.core_type = #tpu.core_type<tc>} {
    %c0 = arith.constant 0 : index
    %c0_0 = arith.constant 0 : index
    %0 = vector.load %arg0[%c0, %c0_0] : memref<300x2xf32, #tpu.memory_space<vmem>>, vector<298x2xf32>
    %c1 = arith.constant 1 : index
    %c0_1 = arith.constant 0 : index
    %1 = vector.load %arg0[%c1, %c0_1] : memref<300x2xf32, #tpu.memory_space<vmem>>, vector<298x2xf32>
    %c2 = arith.constant 2 : index
    %c0_2 = arith.constant 0 : index
    %2 = vector.load %arg0[%c2, %c0_2] : memref<300x2xf32, #tpu.memory_space<vmem>>, vector<298x2xf32>
    %3 = tpu.concatenate %0, %1, %2 in 1 : vector<298x2xf32>, vector<298x2xf32>, vector<298x2xf32> -> vector<298x6xf32>
    %c0_3 = arith.constant 0 : index
    %c0_4 = arith.constant 0 : index
    %4 = vector.load %arg1[%c0_3, %c0_4] : memref<6x10xf32, #tpu.memory_space<vmem>>, vector<6x10xf32>
    %cst = arith.constant dense<0.000000e+00> : vector<298x10xf32>
    %5 = tpu.matmul %3, %4, %cst {dimension_numbers = #tpu.dot_dimension_numbers<[1], [0], [0], [1], [0, 0, 1, 1], [], []>} : vector<298x6xf32>, vector<6x10xf32>, vector<298x10xf32> -> vector<298x10xf32>
    %c0_5 = arith.constant 0 : index
    %c0_6 = arith.constant 0 : index
    %6 = vector.load %arg2[%c0_5, %c0_6] : memref<1x10xf32, #tpu.memory_space<vmem>>, vector<1x10xf32>
    %7 = vector.broadcast %6 : vector<1x10xf32> to vector<298x10xf32>
    %8 = arith.addf %5, %7 : vector<298x10xf32>
    %cst_7 = arith.constant 0.000000e+00 : f32
    %9 = vector.broadcast %cst_7 : f32 to vector<298x10xf32>
    %10 = arith.maximumf %8, %9 : vector<298x10xf32>
    %c0_8 = arith.constant 0 : index
    %c0_9 = arith.constant 0 : index
    %11 = vector.load %arg11[%c0_8, %c0_9] : memref<298x10xf32, #tpu.memory_space<vmem>>, vector<298x10xf32>
    tpu.vector_store %arg11[%c0_8, %c0_9], %10 {strides = array<i32>} : memref<298x10xf32, #tpu.memory_space<vmem>>, vector<298x10xf32>,
    %c0_10 = arith.constant 0 : index
    %c0_11 = arith.constant 0 : index
    %12 = tpu.strided_load %arg11[%c0_10, %c0_11] {strides = array<i32: 2, 1>} : memref<298x10xf32, #tpu.memory_space<vmem>>, vector<149x10xf32>
    %c1_12 = arith.constant 1 : index
    %c0_13 = arith.constant 0 : index
    %13 = tpu.strided_load %arg11[%c1_12, %c0_13] {strides = array<i32: 2, 1>} : memref<298x10xf32, #tpu.memory_space<vmem>>, vector<149x10xf32>
    %14 = arith.maximumf %12, %13 : vector<149x10xf32>
    %15 = vector.extract_strided_slice %14 {offsets = [0, 0], sizes = [146, 10], strides = [1, 1]} : vector<149x10xf32> to vector<146x10xf32>
    %16 = vector.extract_strided_slice %14 {offsets = [1, 0], sizes = [146, 10], strides = [1, 1]} : vector<149x10xf32> to vector<146x10xf32>
    %17 = vector.extract_strided_slice %14 {offsets = [2, 0], sizes = [146, 10], strides = [1, 1]} : vector<149x10xf32> to vector<146x10xf32>
    %18 = vector.extract_strided_slice %14 {offsets = [3, 0], sizes = [146, 10], strides = [1, 1]} : vector<149x10xf32> to vector<146x10xf32>
    %19 = tpu.concatenate %15, %16, %17, %18 in 1 : vector<146x10xf32>, vector<146x10xf32>, vector<146x10xf32>, vector<146x10xf32> -> vector<146x40xf32>
    %c0_14 = arith.constant 0 : index
    %c0_15 = arith.constant 0 : index
    %20 = vector.load %arg3[%c0_14, %c0_15] : memref<40x20xf32, #tpu.memory_space<vmem>>, vector<40x20xf32>
    %cst_16 = arith.constant dense<0.000000e+00> : vector<146x20xf32>
    %21 = tpu.matmul %19, %20, %cst_16 {dimension_numbers = #tpu.dot_dimension_numbers<[1], [0], [0], [1], [0, 0, 1, 1], [], []>} : vector<146x40xf32>, vector<40x20xf32>, vector<146x20xf32> -> vector<146x20xf32>
    %c0_17 = arith.constant 0 : index
    %c0_18 = arith.constant 0 : index
    %22 = vector.load %arg4[%c0_17, %c0_18] : memref<1x20xf32, #tpu.memory_space<vmem>>, vector<1x20xf32>
    %23 = vector.broadcast %22 : vector<1x20xf32> to vector<146x20xf32>
    %24 = arith.addf %21, %23 : vector<146x20xf32>
    %cst_19 = arith.constant 0.000000e+00 : f32
    %25 = vector.broadcast %cst_19 : f32 to vector<146x20xf32>
    %26 = arith.maximumf %24, %25 : vector<146x20xf32>
    %c0_20 = arith.constant 0 : index
    %c0_21 = arith.constant 0 : index
    %27 = vector.load %arg12[%c0_20, %c0_21] : memref<146x20xf32, #tpu.memory_space<vmem>>, vector<146x20xf32>
    tpu.vector_store %arg12[%c0_20, %c0_21], %26 {strides = array<i32>} : memref<146x20xf32, #tpu.memory_space<vmem>>, vector<146x20xf32>,
    %c0_22 = arith.constant 0 : index
    %c0_23 = arith.constant 0 : index
    %28 = tpu.strided_load %arg12[%c0_22, %c0_23] {strides = array<i32: 2, 1>} : memref<146x20xf32, #tpu.memory_space<vmem>>, vector<73x20xf32>
    %c1_24 = arith.constant 1 : index
    %c0_25 = arith.constant 0 : index
    %29 = tpu.strided_load %arg12[%c1_24, %c0_25] {strides = array<i32: 2, 1>} : memref<146x20xf32, #tpu.memory_space<vmem>>, vector<73x20xf32>
    %30 = arith.maximumf %28, %29 : vector<73x20xf32>
    %31 = vector.extract_strided_slice %30 {offsets = [0, 0], sizes = [70, 20], strides = [1, 1]} : vector<73x20xf32> to vector<70x20xf32>
    %32 = vector.extract_strided_slice %30 {offsets = [1, 0], sizes = [70, 20], strides = [1, 1]} : vector<73x20xf32> to vector<70x20xf32>
    %33 = vector.extract_strided_slice %30 {offsets = [2, 0], sizes = [70, 20], strides = [1, 1]} : vector<73x20xf32> to vector<70x20xf32>
    %34 = vector.extract_strided_slice %30 {offsets = [3, 0], sizes = [70, 20], strides = [1, 1]} : vector<73x20xf32> to vector<70x20xf32>
    %35 = tpu.concatenate %31, %32, %33, %34 in 1 : vector<70x20xf32>, vector<70x20xf32>, vector<70x20xf32>, vector<70x20xf32> -> vector<70x80xf32>
    %c0_26 = arith.constant 0 : index
    %c0_27 = arith.constant 0 : index
    %36 = vector.load %arg5[%c0_26, %c0_27] : memref<80x40xf32, #tpu.memory_space<vmem>>, vector<80x40xf32>
    %cst_28 = arith.constant dense<0.000000e+00> : vector<70x40xf32>
    %37 = tpu.matmul %35, %36, %cst_28 {dimension_numbers = #tpu.dot_dimension_numbers<[1], [0], [0], [1], [0, 0, 1, 1], [], []>} : vector<70x80xf32>, vector<80x40xf32>, vector<70x40xf32> -> vector<70x40xf32>
    %c0_29 = arith.constant 0 : index
    %c0_30 = arith.constant 0 : index
    %38 = vector.load %arg6[%c0_29, %c0_30] : memref<1x40xf32, #tpu.memory_space<vmem>>, vector<1x40xf32>
    %39 = vector.broadcast %38 : vector<1x40xf32> to vector<70x40xf32>
    %40 = arith.addf %37, %39 : vector<70x40xf32>
    %c0_31 = arith.constant 0 : index
    %c0_32 = arith.constant 0 : index
    %41 = vector.load %arg13[%c0_31, %c0_32] : memref<70x40xf32, #tpu.memory_space<vmem>>, vector<70x40xf32>
    tpu.vector_store %arg13[%c0_31, %c0_32], %40 {strides = array<i32>} : memref<70x40xf32, #tpu.memory_space<vmem>>, vector<70x40xf32>,
    %c0_33 = arith.constant 0 : index
    %c0_34 = arith.constant 0 : index
    %42 = tpu.strided_load %arg13[%c0_33, %c0_34] {strides = array<i32: 2, 1>} : memref<70x40xf32, #tpu.memory_space<vmem>>, vector<35x40xf32>
    %c1_35 = arith.constant 1 : index
    %c0_36 = arith.constant 0 : index
    %43 = tpu.strided_load %arg13[%c1_35, %c0_36] {strides = array<i32: 2, 1>} : memref<70x40xf32, #tpu.memory_space<vmem>>, vector<35x40xf32>
    %44 = arith.maximumf %42, %43 : vector<35x40xf32>
    %45 = tpu.concatenate %44, %44, %44, %44, %44 in 1 : vector<35x40xf32>, vector<35x40xf32>, vector<35x40xf32>, vector<35x40xf32>, vector<35x40xf32> -> vector<35x200xf32>
    %c0_37 = arith.constant 0 : index
    %c0_38 = arith.constant 0 : index
    %46 = vector.load %arg7[%c0_37, %c0_38] : memref<35x200xf32, #tpu.memory_space<vmem>>, vector<35x200xf32>
    %47 = arith.mulf %45, %46 : vector<35x200xf32>
    %cst_39 = arith.constant dense<0.000000e+00> : vector<200xf32>
    %48 = vector.multi_reduction <add>, %47, %cst_39 [0] : vector<35x200xf32> to vector<200xf32>
    %49 = vector.shape_cast %48 : vector<200xf32> to vector<1x200xf32>
    %c0_40 = arith.constant 0 : index
    %c0_41 = arith.constant 0 : index
    %c0_42 = arith.constant 0 : index
    %50 = vector.load %arg8[%c0_40, %c0_41, %c0_42] : memref<2x200x5xf32, #tpu.memory_space<vmem>>, vector<1x200x5xf32>
    %51 = vector.shape_cast %50 : vector<1x200x5xf32> to vector<200x5xf32>
    %cst_43 = arith.constant dense<0.000000e+00> : vector<1x5xf32>
    %52 = tpu.matmul %49, %51, %cst_43 {dimension_numbers = #tpu.dot_dimension_numbers<[1], [0], [0], [1], [0, 0, 1, 1], [], []>} : vector<1x200xf32>, vector<200x5xf32>, vector<1x5xf32> -> vector<1x5xf32>
    %c0_44 = arith.constant 0 : index
    %c0_45 = arith.constant 0 : index
    %53 = vector.load %arg9[%c0_44, %c0_45] : memref<1x5xf32, #tpu.memory_space<vmem>>, vector<1x5xf32>
    %54 = arith.addf %52, %53 : vector<1x5xf32>
    %c1_46 = arith.constant 1 : index
    %c0_47 = arith.constant 0 : index
    %c0_48 = arith.constant 0 : index
    %55 = vector.load %arg8[%c1_46, %c0_47, %c0_48] : memref<2x200x5xf32, #tpu.memory_space<vmem>>, vector<1x200x5xf32>
    %56 = vector.shape_cast %55 : vector<1x200x5xf32> to vector<200x5xf32>
    %cst_49 = arith.constant dense<0.000000e+00> : vector<1x5xf32>
    %57 = tpu.matmul %49, %56, %cst_49 {dimension_numbers = #tpu.dot_dimension_numbers<[1], [0], [0], [1], [0, 0, 1, 1], [], []>} : vector<1x200xf32>, vector<200x5xf32>, vector<1x5xf32> -> vector<1x5xf32>
    %c0_50 = arith.constant 0 : index
    %c0_51 = arith.constant 0 : index
    %58 = vector.load %arg9[%c0_50, %c0_51] : memref<1x5xf32, #tpu.memory_space<vmem>>, vector<1x5xf32>
    %59 = arith.addf %57, %58 : vector<1x5xf32>
    %60 = tpu.concatenate %54, %59 in 0 : vector<1x5xf32>, vector<1x5xf32> -> vector<2x5xf32>
    %c0_52 = arith.constant 0 : index
    %c0_53 = arith.constant 0 : index
    %61 = vector.load %arg10[%c0_52, %c0_53] : memref<2x5xf32, #tpu.memory_space<vmem>>, vector<2x5xf32>
    tpu.vector_store %arg10[%c0_52, %c0_53], %60 {strides = array<i32>} : memref<2x5xf32, #tpu.memory_space<vmem>>, vector<2x5xf32>,
    return
  }
}

</mosaic_0001>

<llo_original>
// kernel: classification_forward.1
$region0: #{classification_forward.1}
  #allocation0 [shape = 'u32[]', space=smem, size = 0x4, offset = 0x4, fixed_abs, tag = 'smem constant byte address 0x4 - core index']
  #allocation1 [shape = 'u32[72,128]{1,0:T(1,128)}', space=vmem, size = 0x9000, scoped, tag = 'internal scratch']
  #allocation2 [shape = 'f32[298,10]{1,0:T(8,128)}', space=vmem, size = 0x26000, scoped, tag = 'scratch operand']
  #allocation3 [shape = 'f32[146,20]{1,0:T(8,128)}', space=vmem, size = 0x13000, scoped, tag = 'scratch operand']
  #allocation4 [shape = 'f32[70,40]{1,0:T(8,128)}', space=vmem, size = 0x9000, scoped, tag = 'scratch operand']
  %s0 = inlined_call_operand.vmem [shape: f32[300,2], index: 0, kind: input, shape index: {}]
  %s1 = inlined_call_operand.vmem [shape: f32[6,10], index: 1, kind: input, shape index: {}]
  %s2 = inlined_call_operand.vmem [shape: f32[1,10], index: 2, kind: input, shape index: {}]
  %s3 = inlined_call_operand.vmem [shape: f32[40,20], index: 3, kind: input, shape index: {}]
  %s4 = inlined_call_operand.vmem [shape: f32[1,20], index: 4, kind: input, shape index: {}]
  %s5 = inlined_call_operand.vmem [shape: f32[80,40], index: 5, kind: input, shape index: {}]
  %s6 = inlined_call_operand.vmem [shape: f32[1,40], index: 6, kind: input, shape index: {}]
  %s7 = inlined_call_operand.vmem [shape: f32[35,200], index: 7, kind: input, shape index: {}]
  %s8 = inlined_call_operand.vmem [shape: f32[2,200,5], index: 8, kind: input, shape index: {}]
  %s9 = inlined_call_operand.vmem [shape: f32[1,5], index: 9, kind: input, shape index: {}]
  %s10 = inlined_call_operand.hbm [shape: f32[2,5], index: 10, kind: output, shape index: {}]
  %s11 = sld [smem:[#allocation0]]
  $region50: #{classification_forward.1} parent=0
    _
  %s13 = ssub.s32 1, %s11
  %s14 = scalar_select 0, %s13, %s11
  $region1: #{classification_forward.1} parent=0
    #allocation5 [shape = 'u8[1024]{0}', space=vmem, size = 0x400, scoped, tag = 'output window, operand 0, single buffered']
    #allocation6 [shape = 's32[1]{0}', space=sflag, size = 0x4, scoped, tag = 'scoped memory for classification_forward.1']
    %15 = vsyncpa [#allocation6], 0
    // Predicated region
    $region2: #{classification_forward.1} parent=1 // pred_check
      _
    $region3: #{classification_forward.1} parent=1 // pred_check_branch
      %17 = sbr.rel (0) target = $region5
    $region4: #{classification_forward.1} parent=1 // pred_region
      _
    $region5: #{classification_forward.1} parent=1 // pred_fallthru
      _
    // Predicated region
    $region6: #{classification_forward.1} parent=1 // pred_check
      _
    $region7: #{classification_forward.1} parent=1 // pred_check_branch
      %19 = sbr.rel (0) target = $region9
    $region8: #{classification_forward.1} parent=1 // pred_region
      _
    $region9: #{classification_forward.1} parent=1 // pred_fallthru
      _
    // Predicated region
    $region10: #{classification_forward.1} parent=1 // pred_check
      _
    $region11: #{classification_forward.1} parent=1 // pred_check_branch
      %21 = sbr.rel (0) target = $region13
    $region12: #{classification_forward.1} parent=1 // pred_region
      _
    $region13: #{classification_forward.1} parent=1 // pred_fallthru
      _
    // Predicated region
    $region14: #{classification_forward.1} parent=1 // pred_check
      _
    $region15: #{classification_forward.1} parent=1 // pred_check_branch
      %23 = sbr.rel (0) target = $region17
    $region16: #{classification_forward.1} parent=1 // pred_region
      _
    $region17: #{classification_forward.1} parent=1 // pred_fallthru
      _
    // Predicated region
    $region18: #{classification_forward.1} parent=1 // pred_check
      _
    $region19: #{classification_forward.1} parent=1 // pred_check_branch
      %25 = sbr.rel (0) target = $region21
    $region20: #{classification_forward.1} parent=1 // pred_region
      _
    $region21: #{classification_forward.1} parent=1 // pred_fallthru
      _
    // Predicated region
    $region22: #{classification_forward.1} parent=1 // pred_check
      _
    $region23: #{classification_forward.1} parent=1 // pred_check_branch
      %27 = sbr.rel (0) target = $region25
    $region24: #{classification_forward.1} parent=1 // pred_region
      _
    $region25: #{classification_forward.1} parent=1 // pred_fallthru
      _
    // Predicated region
    $region26: #{classification_forward.1} parent=1 // pred_check
      _
    $region27: #{classification_forward.1} parent=1 // pred_check_branch
      %29 = sbr.rel (0) target = $region29
    $region28: #{classification_forward.1} parent=1 // pred_region
      _
    $region29: #{classification_forward.1} parent=1 // pred_fallthru
      _
    // Predicated region
    $region30: #{classification_forward.1} parent=1 // pred_check
      _
    $region31: #{classification_forward.1} parent=1 // pred_check_branch
      %31 = sbr.rel (0) target = $region33
    $region32: #{classification_forward.1} parent=1 // pred_region
      _
    $region33: #{classification_forward.1} parent=1 // pred_fallthru
      _
    // Predicated region
    $region34: #{classification_forward.1} parent=1 // pred_check
      _
    $region35: #{classification_forward.1} parent=1 // pred_check_branch
      %33 = sbr.rel (0) target = $region37
    $region36: #{classification_forward.1} parent=1 // pred_region
      _
    $region37: #{classification_forward.1} parent=1 // pred_fallthru
      _
    // Predicated region
    $region38: #{classification_forward.1} parent=1 // pred_check
      _
    $region39: #{classification_forward.1} parent=1 // pred_check_branch
      %35 = sbr.rel (0) target = $region41
    $region40: #{classification_forward.1} parent=1 // pred_region
      _
    $region41: #{classification_forward.1} parent=1 // pred_fallthru
      _
    %v36 = vld [vmem:[%s0] sm:$0xff]
    %v37 = vld [vmem:[%s0 + $0x8] sm:$0xff]
    %v38 = vld [vmem:[%s0 + $0x10] sm:$0xff]
    %v39 = vld [vmem:[%s0 + $0x18] sm:$0xff]
    %v40 = vld [vmem:[%s0 + $0x20] sm:$0xff]
    %v41 = vld [vmem:[%s0 + $0x28] sm:$0xff]
    %v42 = vld [vmem:[%s0 + $0x30] sm:$0xff]
    %v43 = vld [vmem:[%s0 + $0x38] sm:$0xff]
    %v44 = vld [vmem:[%s0 + $0x40] sm:$0xff]
    %v45 = vld [vmem:[%s0 + $0x48] sm:$0xff]
    %v46 = vld [vmem:[%s0 + $0x50] sm:$0xff]
    %v47 = vld [vmem:[%s0 + $0x58] sm:$0xff]
    %v48 = vld [vmem:[%s0 + $0x60] sm:$0xff]
    %v49 = vld [vmem:[%s0 + $0x68] sm:$0xff]
    %v50 = vld [vmem:[%s0 + $0x70] sm:$0xff]
    %v51 = vld [vmem:[%s0 + $0x78] sm:$0xff]
    %v52 = vld [vmem:[%s0 + $0x80] sm:$0xff]
    %v53 = vld [vmem:[%s0 + $0x88] sm:$0xff]
    %v54 = vld [vmem:[%s0 + $0x90] sm:$0xff]
    %v55 = vld [vmem:[%s0 + $0x98] sm:$0xff]
    %v56 = vld [vmem:[%s0 + $0xa0] sm:$0xff]
    %v57 = vld [vmem:[%s0 + $0xa8] sm:$0xff]
    %v58 = vld [vmem:[%s0 + $0xb0] sm:$0xff]
    %v59 = vld [vmem:[%s0 + $0xb8] sm:$0xff]
    %v60 = vld [vmem:[%s0 + $0xc0] sm:$0xff]
    %v61 = vld [vmem:[%s0 + $0xc8] sm:$0xff]
    %v62 = vld [vmem:[%s0 + $0xd0] sm:$0xff]
    %v63 = vld [vmem:[%s0 + $0xd8] sm:$0xff]
    %v64 = vld [vmem:[%s0 + $0xe0] sm:$0xff]
    %v65 = vld [vmem:[%s0 + $0xe8] sm:$0xff]
    %v66 = vld [vmem:[%s0 + $0xf0] sm:$0xff]
    %v67 = vld [vmem:[%s0 + $0xf8] sm:$0xff]
    %v68 = vld [vmem:[%s0 + $0x100] sm:$0xff]
    %v69 = vld [vmem:[%s0 + $0x108] sm:$0xff]
    %v70 = vld [vmem:[%s0 + $0x110] sm:$0xff]
    %v71 = vld [vmem:[%s0 + $0x118] sm:$0xff]
    %v72 = vld [vmem:[%s0 + $0x120] sm:$0xff]
    %v73 = vld [vmem:[%s0 + $0x128] sm:$0x3]
    %v74 = vld [vmem:[%s0 + $0x1] sm:$0xff]
    %v75 = vld [vmem:[%s0 + $0x9] sm:$0xff]
    %v76 = vld [vmem:[%s0 + $0x11] sm:$0xff]
    %v77 = vld [vmem:[%s0 + $0x19] sm:$0xff]
    %v78 = vld [vmem:[%s0 + $0x21] sm:$0xff]
    %v79 = vld [vmem:[%s0 + $0x29] sm:$0xff]
    %v80 = vld [vmem:[%s0 + $0x31] sm:$0xff]
    %v81 = vld [vmem:[%s0 + $0x39] sm:$0xff]
    %v82 = vld [vmem:[%s0 + $0x41] sm:$0xff]
    %v83 = vld [vmem:[%s0 + $0x49] sm:$0xff]
    %v84 = vld [vmem:[%s0 + $0x51] sm:$0xff]
    %v85 = vld [vmem:[%s0 + $0x59] sm:$0xff]
    %v86 = vld [vmem:[%s0 + $0x61] sm:$0xff]
    %v87 = vld [vmem:[%s0 + $0x69] sm:$0xff]
    %v88 = vld [vmem:[%s0 + $0x71] sm:$0xff]
    %v89 = vld [vmem:[%s0 + $0x79] sm:$0xff]
    %v90 = vld [vmem:[%s0 + $0x81] sm:$0xff]
    %v91 = vld [vmem:[%s0 + $0x89] sm:$0xff]
    %v92 = vld [vmem:[%s0 + $0x91] sm:$0xff]
    %v93 = vld [vmem:[%s0 + $0x99] sm:$0xff]
    %v94 = vld [vmem:[%s0 + $0xa1] sm:$0xff]
    %v95 = vld [vmem:[%s0 + $0xa9] sm:$0xff]
    %v96 = vld [vmem:[%s0 + $0xb1] sm:$0xff]
    %v97 = vld [vmem:[%s0 + $0xb9] sm:$0xff]
    %v98 = vld [vmem:[%s0 + $0xc1] sm:$0xff]
    %v99 = vld [vmem:[%s0 + $0xc9] sm:$0xff]
    %v100 = vld [vmem:[%s0 + $0xd1] sm:$0xff]
    %v101 = vld [vmem:[%s0 + $0xd9] sm:$0xff]
    %v102 = vld [vmem:[%s0 + $0xe1] sm:$0xff]
    %v103 = vld [vmem:[%s0 + $0xe9] sm:$0xff]
    %v104 = vld [vmem:[%s0 + $0xf1] sm:$0xff]
    %v105 = vld [vmem:[%s0 + $0xf9] sm:$0xff]
    %v106 = vld [vmem:[%s0 + $0x101] sm:$0xff]
    %v107 = vld [vmem:[%s0 + $0x109] sm:$0xff]
    %v108 = vld [vmem:[%s0 + $0x111] sm:$0xff]
    %v109 = vld [vmem:[%s0 + $0x119] sm:$0xff]
    %v110 = vld [vmem:[%s0 + $0x121] sm:$0xff]
    %v111 = vld [vmem:[%s0 + $0x129] sm:$0x3]
    %v112 = vld [vmem:[%s0 + $0x2] sm:$0xff]
    %v113 = vld [vmem:[%s0 + $0xa] sm:$0xff]
    %v114 = vld [vmem:[%s0 + $0x12] sm:$0xff]
    %v115 = vld [vmem:[%s0 + $0x1a] sm:$0xff]
    %v116 = vld [vmem:[%s0 + $0x22] sm:$0xff]
    %v117 = vld [vmem:[%s0 + $0x2a] sm:$0xff]
    %v118 = vld [vmem:[%s0 + $0x32] sm:$0xff]
    %v119 = vld [vmem:[%s0 + $0x3a] sm:$0xff]
    %v120 = vld [vmem:[%s0 + $0x42] sm:$0xff]
    %v121 = vld [vmem:[%s0 + $0x4a] sm:$0xff]
    %v122 = vld [vmem:[%s0 + $0x52] sm:$0xff]
    %v123 = vld [vmem:[%s0 + $0x5a] sm:$0xff]
    %v124 = vld [vmem:[%s0 + $0x62] sm:$0xff]
    %v125 = vld [vmem:[%s0 + $0x6a] sm:$0xff]
    %v126 = vld [vmem:[%s0 + $0x72] sm:$0xff]
    %v127 = vld [vmem:[%s0 + $0x7a] sm:$0xff]
    %v128 = vld [vmem:[%s0 + $0x82] sm:$0xff]
    %v129 = vld [vmem:[%s0 + $0x8a] sm:$0xff]
    %v130 = vld [vmem:[%s0 + $0x92] sm:$0xff]
    %v131 = vld [vmem:[%s0 + $0x9a] sm:$0xff]
    %v132 = vld [vmem:[%s0 + $0xa2] sm:$0xff]
    %v133 = vld [vmem:[%s0 + $0xaa] sm:$0xff]
    %v134 = vld [vmem:[%s0 + $0xb2] sm:$0xff]
    %v135 = vld [vmem:[%s0 + $0xba] sm:$0xff]
    %v136 = vld [vmem:[%s0 + $0xc2] sm:$0xff]
    %v137 = vld [vmem:[%s0 + $0xca] sm:$0xff]
    %v138 = vld [vmem:[%s0 + $0xd2] sm:$0xff]
    %v139 = vld [vmem:[%s0 + $0xda] sm:$0xff]
    %v140 = vld [vmem:[%s0 + $0xe2] sm:$0xff]
    %v141 = vld [vmem:[%s0 + $0xea] sm:$0xff]
    %v142 = vld [vmem:[%s0 + $0xf2] sm:$0xff]
    %v143 = vld [vmem:[%s0 + $0xfa] sm:$0xff]
    %v144 = vld [vmem:[%s0 + $0x102] sm:$0xff]
    %v145 = vld [vmem:[%s0 + $0x10a] sm:$0xff]
    %v146 = vld [vmem:[%s0 + $0x112] sm:$0xff]
    %v147 = vld [vmem:[%s0 + $0x11a] sm:$0xff]
    %v148 = vld [vmem:[%s0 + $0x122] sm:$0xff]
    %v149 = vld [vmem:[%s0 + $0x12a] sm:$0x3]
    %188 = vrot.lane.b32.xlu0 %v74, 2
    %v189 = vpop.permute.xlu0 %188
    %190 = vrot.lane.b32.xlu0 %v75, 2
    %v191 = vpop.permute.xlu0 %190
    %192 = vrot.lane.b32.xlu0 %v76, 2
    %v193 = vpop.permute.xlu0 %192
    %194 = vrot.lane.b32.xlu0 %v77, 2
    %v195 = vpop.permute.xlu0 %194
    %196 = vrot.lane.b32.xlu0 %v78, 2
    %v197 = vpop.permute.xlu0 %196
    %198 = vrot.lane.b32.xlu0 %v79, 2
    %v199 = vpop.permute.xlu0 %198
    %200 = vrot.lane.b32.xlu0 %v80, 2
    %v201 = vpop.permute.xlu0 %200
    %202 = vrot.lane.b32.xlu0 %v81, 2
    %v203 = vpop.permute.xlu0 %202
    %204 = vrot.lane.b32.xlu0 %v82, 2
    %v205 = vpop.permute.xlu0 %204
    %206 = vrot.lane.b32.xlu0 %v83, 2
    %v207 = vpop.permute.xlu0 %206
    %208 = vrot.lane.b32.xlu0 %v84, 2
    %v209 = vpop.permute.xlu0 %208
    %210 = vrot.lane.b32.xlu0 %v85, 2
    %v211 = vpop.permute.xlu0 %210
    %212 = vrot.lane.b32.xlu0 %v86, 2
    %v213 = vpop.permute.xlu0 %212
    %214 = vrot.lane.b32.xlu0 %v87, 2
    %v215 = vpop.permute.xlu0 %214
    %216 = vrot.lane.b32.xlu0 %v88, 2
    %v217 = vpop.permute.xlu0 %216
    %218 = vrot.lane.b32.xlu0 %v89, 2
    %v219 = vpop.permute.xlu0 %218
    %220 = vrot.lane.b32.xlu0 %v90, 2
    %v221 = vpop.permute.xlu0 %220
    %222 = vrot.lane.b32.xlu0 %v91, 2
    %v223 = vpop.permute.xlu0 %222
    %224 = vrot.lane.b32.xlu0 %v92, 2
    %v225 = vpop.permute.xlu0 %224
    %226 = vrot.lane.b32.xlu0 %v93, 2
    %v227 = vpop.permute.xlu0 %226
    %228 = vrot.lane.b32.xlu0 %v94, 2
    %v229 = vpop.permute.xlu0 %228
    %230 = vrot.lane.b32.xlu0 %v95, 2
    %v231 = vpop.permute.xlu0 %230
    %232 = vrot.lane.b32.xlu0 %v96, 2
    %v233 = vpop.permute.xlu0 %232
    %234 = vrot.lane.b32.xlu0 %v97, 2
    %v235 = vpop.permute.xlu0 %234
    %236 = vrot.lane.b32.xlu0 %v98, 2
    %v237 = vpop.permute.xlu0 %236
    %238 = vrot.lane.b32.xlu0 %v99, 2
    %v239 = vpop.permute.xlu0 %238
    %240 = vrot.lane.b32.xlu0 %v100, 2
    %v241 = vpop.permute.xlu0 %240
    %242 = vrot.lane.b32.xlu0 %v101, 2
    %v243 = vpop.permute.xlu0 %242
    %244 = vrot.lane.b32.xlu0 %v102, 2
    %v245 = vpop.permute.xlu0 %244
    %246 = vrot.lane.b32.xlu0 %v103, 2
    %v247 = vpop.permute.xlu0 %246
    %248 = vrot.lane.b32.xlu0 %v104, 2
    %v249 = vpop.permute.xlu0 %248
    %250 = vrot.lane.b32.xlu0 %v105, 2
    %v251 = vpop.permute.xlu0 %250
    %252 = vrot.lane.b32.xlu0 %v106, 2
    %v253 = vpop.permute.xlu0 %252
    %254 = vrot.lane.b32.xlu0 %v107, 2
    %v255 = vpop.permute.xlu0 %254
    %256 = vrot.lane.b32.xlu0 %v108, 2
    %v257 = vpop.permute.xlu0 %256
    %258 = vrot.lane.b32.xlu0 %v109, 2
    %v259 = vpop.permute.xlu0 %258
    %260 = vrot.lane.b32.xlu0 %v110, 2
    %v261 = vpop.permute.xlu0 %260
    %262 = vrot.lane.b32.xlu0 %v111, 2
    %v263 = vpop.permute.xlu0 %262
    %340 = vrot.lane.b32.xlu0 %v112, 4
    %v341 = vpop.permute.xlu0 %340
    %342 = vrot.lane.b32.xlu0 %v113, 4
    %v343 = vpop.permute.xlu0 %342
    %344 = vrot.lane.b32.xlu0 %v114, 4
    %v345 = vpop.permute.xlu0 %344
    %346 = vrot.lane.b32.xlu0 %v115, 4
    %v347 = vpop.permute.xlu0 %346
    %348 = vrot.lane.b32.xlu0 %v116, 4
    %v349 = vpop.permute.xlu0 %348
    %350 = vrot.lane.b32.xlu0 %v117, 4
    %v351 = vpop.permute.xlu0 %350
    %352 = vrot.lane.b32.xlu0 %v118, 4
    %v353 = vpop.permute.xlu0 %352
    %354 = vrot.lane.b32.xlu0 %v119, 4
    %v355 = vpop.permute.xlu0 %354
    %356 = vrot.lane.b32.xlu0 %v120, 4
    %v357 = vpop.permute.xlu0 %356
    %358 = vrot.lane.b32.xlu0 %v121, 4
    %v359 = vpop.permute.xlu0 %358
    %360 = vrot.lane.b32.xlu0 %v122, 4
    %v361 = vpop.permute.xlu0 %360
    %362 = vrot.lane.b32.xlu0 %v123, 4
    %v363 = vpop.permute.xlu0 %362
    %364 = vrot.lane.b32.xlu0 %v124, 4
    %v365 = vpop.permute.xlu0 %364
    %366 = vrot.lane.b32.xlu0 %v125, 4
    %v367 = vpop.permute.xlu0 %366
    %368 = vrot.lane.b32.xlu0 %v126, 4
    %v369 = vpop.permute.xlu0 %368
    %370 = vrot.lane.b32.xlu0 %v127, 4
    %v371 = vpop.permute.xlu0 %370
    %372 = vrot.lane.b32.xlu0 %v128, 4
    %v373 = vpop.permute.xlu0 %372
    %374 = vrot.lane.b32.xlu0 %v129, 4
    %v375 = vpop.permute.xlu0 %374
    %376 = vrot.lane.b32.xlu0 %v130, 4
    %v377 = vpop.permute.xlu0 %376
    %378 = vrot.lane.b32.xlu0 %v131, 4
    %v379 = vpop.permute.xlu0 %378
    %380 = vrot.lane.b32.xlu0 %v132, 4
    %v381 = vpop.permute.xlu0 %380
    %382 = vrot.lane.b32.xlu0 %v133, 4
    %v383 = vpop.permute.xlu0 %382
    %384 = vrot.lane.b32.xlu0 %v134, 4
    %v385 = vpop.permute.xlu0 %384
    %386 = vrot.lane.b32.xlu0 %v135, 4
    %v387 = vpop.permute.xlu0 %386
    %388 = vrot.lane.b32.xlu0 %v136, 4
    %v389 = vpop.permute.xlu0 %388
    %390 = vrot.lane.b32.xlu0 %v137, 4
    %v391 = vpop.permute.xlu0 %390
    %392 = vrot.lane.b32.xlu0 %v138, 4
    %v393 = vpop.permute.xlu0 %392
    %394 = vrot.lane.b32.xlu0 %v139, 4
    %v395 = vpop.permute.xlu0 %394
    %396 = vrot.lane.b32.xlu0 %v140, 4
    %v397 = vpop.permute.xlu0 %396
    %398 = vrot.lane.b32.xlu0 %v141, 4
    %v399 = vpop.permute.xlu0 %398
    %400 = vrot.lane.b32.xlu0 %v142, 4
    %v401 = vpop.permute.xlu0 %400
    %402 = vrot.lane.b32.xlu0 %v143, 4
    %v403 = vpop.permute.xlu0 %402
    %404 = vrot.lane.b32.xlu0 %v144, 4
    %v405 = vpop.permute.xlu0 %404
    %406 = vrot.lane.b32.xlu0 %v145, 4
    %v407 = vpop.permute.xlu0 %406
    %408 = vrot.lane.b32.xlu0 %v146, 4
    %v409 = vpop.permute.xlu0 %408
    %410 = vrot.lane.b32.xlu0 %v147, 4
    %v411 = vpop.permute.xlu0 %410
    %412 = vrot.lane.b32.xlu0 %v148, 4
    %v413 = vpop.permute.xlu0 %412
    %414 = vrot.lane.b32.xlu0 %v149, 4
    %v415 = vpop.permute.xlu0 %414
    %vm454 = vcmask 15360
    %v455 = vsel %vm454, %v36, %v189
    %v456 = vsel %vm454, %v37, %v191
    %v457 = vsel %vm454, %v38, %v193
    %v458 = vsel %vm454, %v39, %v195
    %v459 = vsel %vm454, %v40, %v197
    %v460 = vsel %vm454, %v41, %v199
    %v461 = vsel %vm454, %v42, %v201
    %v462 = vsel %vm454, %v43, %v203
    %v463 = vsel %vm454, %v44, %v205
    %v464 = vsel %vm454, %v45, %v207
    %v465 = vsel %vm454, %v46, %v209
    %v466 = vsel %vm454, %v47, %v211
    %v467 = vsel %vm454, %v48, %v213
    %v468 = vsel %vm454, %v49, %v215
    %v469 = vsel %vm454, %v50, %v217
    %v470 = vsel %vm454, %v51, %v219
    %v471 = vsel %vm454, %v52, %v221
    %v472 = vsel %vm454, %v53, %v223
    %v473 = vsel %vm454, %v54, %v225
    %v474 = vsel %vm454, %v55, %v227
    %v475 = vsel %vm454, %v56, %v229
    %v476 = vsel %vm454, %v57, %v231
    %v477 = vsel %vm454, %v58, %v233
    %v478 = vsel %vm454, %v59, %v235
    %v479 = vsel %vm454, %v60, %v237
    %v480 = vsel %vm454, %v61, %v239
    %v481 = vsel %vm454, %v62, %v241
    %v482 = vsel %vm454, %v63, %v243
    %v483 = vsel %vm454, %v64, %v245
    %v484 = vsel %vm454, %v65, %v247
    %v485 = vsel %vm454, %v66, %v249
    %v486 = vsel %vm454, %v67, %v251
    %v487 = vsel %vm454, %v68, %v253
    %v488 = vsel %vm454, %v69, %v255
    %v489 = vsel %vm454, %v70, %v257
    %v490 = vsel %vm454, %v71, %v259
    %v491 = vsel %vm454, %v72, %v261
    %v492 = vsel %vm454, %v73, %v263
    %vm493 = vcmask 31744
    %v494 = vsel %vm493, %v455, %v341
    %v495 = vsel %vm493, %v456, %v343
    %v496 = vsel %vm493, %v457, %v345
    %v497 = vsel %vm493, %v458, %v347
    %v498 = vsel %vm493, %v459, %v349
    %v499 = vsel %vm493, %v460, %v351
    %v500 = vsel %vm493, %v461, %v353
    %v501 = vsel %vm493, %v462, %v355
    %v502 = vsel %vm493, %v463, %v357
    %v503 = vsel %vm493, %v464, %v359
    %v504 = vsel %vm493, %v465, %v361
    %v505 = vsel %vm493, %v466, %v363
    %v506 = vsel %vm493, %v467, %v365
    %v507 = vsel %vm493, %v468, %v367
    %v508 = vsel %vm493, %v469, %v369
    %v509 = vsel %vm493, %v470, %v371
    %v510 = vsel %vm493, %v471, %v373
    %v511 = vsel %vm493, %v472, %v375
    %v512 = vsel %vm493, %v473, %v377
    %v513 = vsel %vm493, %v474, %v379
    %v514 = vsel %vm493, %v475, %v381
    %v515 = vsel %vm493, %v476, %v383
    %v516 = vsel %vm493, %v477, %v385
    %v517 = vsel %vm493, %v478, %v387
    %v518 = vsel %vm493, %v479, %v389
    %v519 = vsel %vm493, %v480, %v391
    %v520 = vsel %vm493, %v481, %v393
    %v521 = vsel %vm493, %v482, %v395
    %v522 = vsel %vm493, %v483, %v397
    %v523 = vsel %vm493, %v484, %v399
    %v524 = vsel %vm493, %v485, %v401
    %v525 = vsel %vm493, %v486, %v403
    %v526 = vsel %vm493, %v487, %v405
    %v527 = vsel %vm493, %v488, %v407
    %v528 = vsel %vm493, %v489, %v409
    %v529 = vsel %vm493, %v490, %v411
    %v530 = vsel %vm493, %v491, %v413
    %v531 = vsel %vm493, %v492, %v415
    %v532 = vld [vmem:[%s1] sm:$0x3f]
    %v533 = vld [vmem:[%s2] sm:$0x1]
    %v535 = vperm.slane %v533, 0
    %vm537 = vcmask 48128
    %v539 = vsel %vm537, %v494, 0
    %v542 = vsel %vm537, %v495, 0
    %v545 = vsel %vm537, %v496, 0
    %v548 = vsel %vm537, %v497, 0
    %v551 = vsel %vm537, %v498, 0
    %v554 = vsel %vm537, %v499, 0
    %v557 = vsel %vm537, %v500, 0
    %v560 = vsel %vm537, %v501, 0
    %v563 = vsel %vm537, %v502, 0
    %v566 = vsel %vm537, %v503, 0
    %v569 = vsel %vm537, %v504, 0
    %v572 = vsel %vm537, %v505, 0
    %v575 = vsel %vm537, %v506, 0
    %v578 = vsel %vm537, %v507, 0
    %v581 = vsel %vm537, %v508, 0
    %v584 = vsel %vm537, %v509, 0
    %v587 = vsel %vm537, %v510, 0
    %v590 = vsel %vm537, %v511, 0
    %v593 = vsel %vm537, %v512, 0
    %v596 = vsel %vm537, %v513, 0
    %v599 = vsel %vm537, %v514, 0
    %v602 = vsel %vm537, %v515, 0
    %v605 = vsel %vm537, %v516, 0
    %v608 = vsel %vm537, %v517, 0
    %v611 = vsel %vm537, %v518, 0
    %v614 = vsel %vm537, %v519, 0
    %v617 = vsel %vm537, %v520, 0
    %v620 = vsel %vm537, %v521, 0
    %v623 = vsel %vm537, %v522, 0
    %v626 = vsel %vm537, %v523, 0
    %v629 = vsel %vm537, %v524, 0
    %v632 = vsel %vm537, %v525, 0
    %v635 = vsel %vm537, %v526, 0
    %v638 = vsel %vm537, %v527, 0
    %v641 = vsel %vm537, %v528, 0
    %v644 = vsel %vm537, %v529, 0
    %v647 = vsel %vm537, %v530, 0
    %v650 = vsel %vm537, %v531, 0
    %vm652 = vcmask 1045504
    %v654 = vsel %vm652, %v532, 0
    %656 = vmatpush.msra.mxu0 0.0
    %657 = vmatpush.msra.mxu0 0.0
    %658 = vmatpush.msra.mxu0 0.0
    %659 = vmatpush.msra.mxu0 0.0
    %660 = vmatpush.msra.mxu0 0.0
    %661 = vmatpush.msra.mxu0 0.0
    %662 = vmatpush.msra.mxu0 0.0
    %663 = vmatpush.msra.mxu0 0.0
    %664 = vmatpush.msra.mxu0 0.0
    %665 = vmatpush.msra.mxu0 0.0
    %666 = vmatpush.msra.mxu0 0.0
    %667 = vmatpush.msra.mxu0 0.0
    %668 = vmatpush.msra.mxu0 0.0
    %669 = vmatpush.msra.mxu0 0.0
    %670 = vmatpush.msra.mxu0 0.0
    %671 = vmatpush.msra.mxu0 %v654
    %672 = vmatmul.f32.gmra.mxu0 %v539
    %v673 = vpop.f32.mrf.mxu0
    %v674 = vadd.f32 %v535, %v673
    %675 = vmatmul.f32.gmra.mxu0 %v542
    %v676 = vpop.f32.mrf.mxu0
    %v677 = vadd.f32 %v535, %v676
    %678 = vmatmul.f32.gmra.mxu0 %v545
    %v679 = vpop.f32.mrf.mxu0
    %v680 = vadd.f32 %v535, %v679
    %681 = vmatmul.f32.gmra.mxu0 %v548
    %v682 = vpop.f32.mrf.mxu0
    %v683 = vadd.f32 %v535, %v682
    %684 = vmatmul.f32.gmra.mxu0 %v551
    %v685 = vpop.f32.mrf.mxu0
    %v686 = vadd.f32 %v535, %v685
    %687 = vmatmul.f32.gmra.mxu0 %v554
    %v688 = vpop.f32.mrf.mxu0
    %v689 = vadd.f32 %v535, %v688
    %690 = vmatmul.f32.gmra.mxu0 %v557
    %v691 = vpop.f32.mrf.mxu0
    %v692 = vadd.f32 %v535, %v691
    %693 = vmatmul.f32.gmra.mxu0 %v560
    %v694 = vpop.f32.mrf.mxu0
    %v695 = vadd.f32 %v535, %v694
    %696 = vmatmul.f32.gmra.mxu0 %v563
    %v697 = vpop.f32.mrf.mxu0
    %v698 = vadd.f32 %v535, %v697
    %699 = vmatmul.f32.gmra.mxu0 %v566
    %v700 = vpop.f32.mrf.mxu0
    %v701 = vadd.f32 %v535, %v700
    %702 = vmatmul.f32.gmra.mxu0 %v569
    %v703 = vpop.f32.mrf.mxu0
    %v704 = vadd.f32 %v535, %v703
    %705 = vmatmul.f32.gmra.mxu0 %v572
    %v706 = vpop.f32.mrf.mxu0
    %v707 = vadd.f32 %v535, %v706
    %708 = vmatmul.f32.gmra.mxu0 %v575
    %v709 = vpop.f32.mrf.mxu0
    %v710 = vadd.f32 %v535, %v709
    %711 = vmatmul.f32.gmra.mxu0 %v578
    %v712 = vpop.f32.mrf.mxu0
    %v713 = vadd.f32 %v535, %v712
    %714 = vmatmul.f32.gmra.mxu0 %v581
    %v715 = vpop.f32.mrf.mxu0
    %v716 = vadd.f32 %v535, %v715
    %717 = vmatmul.f32.gmra.mxu0 %v584
    %v718 = vpop.f32.mrf.mxu0
    %v719 = vadd.f32 %v535, %v718
    %720 = vmatmul.f32.gmra.mxu0 %v587
    %v721 = vpop.f32.mrf.mxu0
    %v722 = vadd.f32 %v535, %v721
    %723 = vmatmul.f32.gmra.mxu0 %v590
    %v724 = vpop.f32.mrf.mxu0
    %v725 = vadd.f32 %v535, %v724
    %726 = vmatmul.f32.gmra.mxu0 %v593
    %v727 = vpop.f32.mrf.mxu0
    %v728 = vadd.f32 %v535, %v727
    %729 = vmatmul.f32.gmra.mxu0 %v596
    %v730 = vpop.f32.mrf.mxu0
    %v731 = vadd.f32 %v535, %v730
    %732 = vmatmul.f32.gmra.mxu0 %v599
    %v733 = vpop.f32.mrf.mxu0
    %v734 = vadd.f32 %v535, %v733
    %735 = vmatmul.f32.gmra.mxu0 %v602
    %v736 = vpop.f32.mrf.mxu0
    %v737 = vadd.f32 %v535, %v736
    %738 = vmatmul.f32.gmra.mxu0 %v605
    %v739 = vpop.f32.mrf.mxu0
    %v740 = vadd.f32 %v535, %v739
    %741 = vmatmul.f32.gmra.mxu0 %v608
    %v742 = vpop.f32.mrf.mxu0
    %v743 = vadd.f32 %v535, %v742
    %744 = vmatmul.f32.gmra.mxu0 %v611
    %v745 = vpop.f32.mrf.mxu0
    %v746 = vadd.f32 %v535, %v745
    %747 = vmatmul.f32.gmra.mxu0 %v614
    %v748 = vpop.f32.mrf.mxu0
    %v749 = vadd.f32 %v535, %v748
    %750 = vmatmul.f32.gmra.mxu0 %v617
    %v751 = vpop.f32.mrf.mxu0
    %v752 = vadd.f32 %v535, %v751
    %753 = vmatmul.f32.gmra.mxu0 %v620
    %v754 = vpop.f32.mrf.mxu0
    %v755 = vadd.f32 %v535, %v754
    %756 = vmatmul.f32.gmra.mxu0 %v623
    %v757 = vpop.f32.mrf.mxu0
    %v758 = vadd.f32 %v535, %v757
    %759 = vmatmul.f32.gmra.mxu0 %v626
    %v760 = vpop.f32.mrf.mxu0
    %v761 = vadd.f32 %v535, %v760
    %762 = vmatmul.f32.gmra.mxu0 %v629
    %v763 = vpop.f32.mrf.mxu0
    %v764 = vadd.f32 %v535, %v763
    %765 = vmatmul.f32.gmra.mxu0 %v632
    %v766 = vpop.f32.mrf.mxu0
    %v767 = vadd.f32 %v535, %v766
    %768 = vmatmul.f32.gmra.mxu0 %v635
    %v769 = vpop.f32.mrf.mxu0
    %v770 = vadd.f32 %v535, %v769
    %771 = vmatmul.f32.gmra.mxu0 %v638
    %v772 = vpop.f32.mrf.mxu0
    %v773 = vadd.f32 %v535, %v772
    %774 = vmatmul.f32.gmra.mxu0 %v641
    %v775 = vpop.f32.mrf.mxu0
    %v776 = vadd.f32 %v535, %v775
    %777 = vmatmul.f32.gmra.mxu0 %v644
    %v778 = vpop.f32.mrf.mxu0
    %v779 = vadd.f32 %v535, %v778
    %780 = vmatmul.f32.gmra.mxu0 %v647
    %v781 = vpop.f32.mrf.mxu0
    %v782 = vadd.f32 %v535, %v781
    %783 = vmatmul.f32.gmra.mxu0 %v650
    %v784 = vpop.f32.mrf.mxu0
    %v785 = vadd.f32 %v535, %v784
    %786 = vdwg.mxu0
    %v787 = vmax.f32 %v674, 0.0
    %v788 = vmax.f32 %v677, 0.0
    %v789 = vmax.f32 %v680, 0.0
    %v790 = vmax.f32 %v683, 0.0
    %v791 = vmax.f32 %v686, 0.0
    %v792 = vmax.f32 %v689, 0.0
    %v793 = vmax.f32 %v692, 0.0
    %v794 = vmax.f32 %v695, 0.0
    %v795 = vmax.f32 %v698, 0.0
    %v796 = vmax.f32 %v701, 0.0
    %v797 = vmax.f32 %v704, 0.0
    %v798 = vmax.f32 %v707, 0.0
    %v799 = vmax.f32 %v710, 0.0
    %v800 = vmax.f32 %v713, 0.0
    %v801 = vmax.f32 %v716, 0.0
    %v802 = vmax.f32 %v719, 0.0
    %v803 = vmax.f32 %v722, 0.0
    %v804 = vmax.f32 %v725, 0.0
    %v805 = vmax.f32 %v728, 0.0
    %v806 = vmax.f32 %v731, 0.0
    %v807 = vmax.f32 %v734, 0.0
    %v808 = vmax.f32 %v737, 0.0
    %v809 = vmax.f32 %v740, 0.0
    %v810 = vmax.f32 %v743, 0.0
    %v811 = vmax.f32 %v746, 0.0
    %v812 = vmax.f32 %v749, 0.0
    %v813 = vmax.f32 %v752, 0.0
    %v814 = vmax.f32 %v755, 0.0
    %v815 = vmax.f32 %v758, 0.0
    %v816 = vmax.f32 %v761, 0.0
    %v817 = vmax.f32 %v764, 0.0
    %v818 = vmax.f32 %v767, 0.0
    %v819 = vmax.f32 %v770, 0.0
    %v820 = vmax.f32 %v773, 0.0
    %v821 = vmax.f32 %v776, 0.0
    %v822 = vmax.f32 %v779, 0.0
    %v823 = vmax.f32 %v782, 0.0
    %v824 = vmax.f32 %v785, 0.0
    %vm825 = vcmask 80896
    %826 = vst.msk [vmem:[#allocation2] sm:$0xff] %vm825, %v787
    %827 = vst.msk [vmem:[#allocation2 + $0x8] sm:$0xff] %vm825, %v788
    %828 = vst.msk [vmem:[#allocation2 + $0x10] sm:$0xff] %vm825, %v789
    %829 = vst.msk [vmem:[#allocation2 + $0x18] sm:$0xff] %vm825, %v790
    %830 = vst.msk [vmem:[#allocation2 + $0x20] sm:$0xff] %vm825, %v791
    %831 = vst.msk [vmem:[#allocation2 + $0x28] sm:$0xff] %vm825, %v792
    %832 = vst.msk [vmem:[#allocation2 + $0x30] sm:$0xff] %vm825, %v793
    %833 = vst.msk [vmem:[#allocation2 + $0x38] sm:$0xff] %vm825, %v794
    %834 = vst.msk [vmem:[#allocation2 + $0x40] sm:$0xff] %vm825, %v795
    %835 = vst.msk [vmem:[#allocation2 + $0x48] sm:$0xff] %vm825, %v796
    %836 = vst.msk [vmem:[#allocation2 + $0x50] sm:$0xff] %vm825, %v797
    %837 = vst.msk [vmem:[#allocation2 + $0x58] sm:$0xff] %vm825, %v798
    %838 = vst.msk [vmem:[#allocation2 + $0x60] sm:$0xff] %vm825, %v799
    %839 = vst.msk [vmem:[#allocation2 + $0x68] sm:$0xff] %vm825, %v800
    %840 = vst.msk [vmem:[#allocation2 + $0x70] sm:$0xff] %vm825, %v801
    %841 = vst.msk [vmem:[#allocation2 + $0x78] sm:$0xff] %vm825, %v802
    %842 = vst.msk [vmem:[#allocation2 + $0x80] sm:$0xff] %vm825, %v803
    %843 = vst.msk [vmem:[#allocation2 + $0x88] sm:$0xff] %vm825, %v804
    %844 = vst.msk [vmem:[#allocation2 + $0x90] sm:$0xff] %vm825, %v805
    %845 = vst.msk [vmem:[#allocation2 + $0x98] sm:$0xff] %vm825, %v806
    %846 = vst.msk [vmem:[#allocation2 + $0xa0] sm:$0xff] %vm825, %v807
    %847 = vst.msk [vmem:[#allocation2 + $0xa8] sm:$0xff] %vm825, %v808
    %848 = vst.msk [vmem:[#allocation2 + $0xb0] sm:$0xff] %vm825, %v809
    %849 = vst.msk [vmem:[#allocation2 + $0xb8] sm:$0xff] %vm825, %v810
    %850 = vst.msk [vmem:[#allocation2 + $0xc0] sm:$0xff] %vm825, %v811
    %851 = vst.msk [vmem:[#allocation2 + $0xc8] sm:$0xff] %vm825, %v812
    %852 = vst.msk [vmem:[#allocation2 + $0xd0] sm:$0xff] %vm825, %v813
    %853 = vst.msk [vmem:[#allocation2 + $0xd8] sm:$0xff] %vm825, %v814
    %854 = vst.msk [vmem:[#allocation2 + $0xe0] sm:$0xff] %vm825, %v815
    %855 = vst.msk [vmem:[#allocation2 + $0xe8] sm:$0xff] %vm825, %v816
    %856 = vst.msk [vmem:[#allocation2 + $0xf0] sm:$0xff] %vm825, %v817
    %857 = vst.msk [vmem:[#allocation2 + $0xf8] sm:$0xff] %vm825, %v818
    %858 = vst.msk [vmem:[#allocation2 + $0x100] sm:$0xff] %vm825, %v819
    %859 = vst.msk [vmem:[#allocation2 + $0x108] sm:$0xff] %vm825, %v820
    %860 = vst.msk [vmem:[#allocation2 + $0x110] sm:$0xff] %vm825, %v821
    %861 = vst.msk [vmem:[#allocation2 + $0x118] sm:$0xff] %vm825, %v822
    %862 = vst.msk [vmem:[#allocation2 + $0x120] sm:$0xff] %vm825, %v823
    %vm863 = vcmask 74752
    %864 = vst.msk [vmem:[#allocation2 + $0x128] sm:$0x3] %vm863, %v824
    %v865 = vld [vmem:[#allocation2] ss:$2 sm:$0xff]
    %s866 = scalar_lea.vmem [#allocation2], 16
    %v867 = vld [vmem:[%s866] ss:$2 sm:$0xff]
    %s868 = scalar_lea.vmem [#allocation2], 32
    %v869 = vld [vmem:[%s868] ss:$2 sm:$0xff]
    %s870 = scalar_lea.vmem [#allocation2], 48
    %v871 = vld [vmem:[%s870] ss:$2 sm:$0xff]
    %s872 = scalar_lea.vmem [#allocation2], 64
    %v873 = vld [vmem:[%s872] ss:$2 sm:$0xff]
    %s874 = scalar_lea.vmem [#allocation2], 80
    %v875 = vld [vmem:[%s874] ss:$2 sm:$0xff]
    %s876 = scalar_lea.vmem [#allocation2], 96
    %v877 = vld [vmem:[%s876] ss:$2 sm:$0xff]
    %s878 = scalar_lea.vmem [#allocation2], 112
    %v879 = vld [vmem:[%s878] ss:$2 sm:$0xff]
    %s880 = scalar_lea.vmem [#allocation2], 128
    %v881 = vld [vmem:[%s880] ss:$2 sm:$0xff]
    %s882 = scalar_lea.vmem [#allocation2], 144
    %v883 = vld [vmem:[%s882] ss:$2 sm:$0xff]
    %s884 = scalar_lea.vmem [#allocation2], 160
    %v885 = vld [vmem:[%s884] ss:$2 sm:$0xff]
    %s886 = scalar_lea.vmem [#allocation2], 176
    %v887 = vld [vmem:[%s886] ss:$2 sm:$0xff]
    %s888 = scalar_lea.vmem [#allocation2], 192
    %v889 = vld [vmem:[%s888] ss:$2 sm:$0xff]
    %s890 = scalar_lea.vmem [#allocation2], 208
    %v891 = vld [vmem:[%s890] ss:$2 sm:$0xff]
    %s892 = scalar_lea.vmem [#allocation2], 224
    %v893 = vld [vmem:[%s892] ss:$2 sm:$0xff]
    %s894 = scalar_lea.vmem [#allocation2], 240
    %v895 = vld [vmem:[%s894] ss:$2 sm:$0xff]
    %s896 = scalar_lea.vmem [#allocation2], 256
    %v897 = vld [vmem:[%s896] ss:$2 sm:$0xff]
    %s898 = scalar_lea.vmem [#allocation2], 272
    %v899 = vld [vmem:[%s898] ss:$2 sm:$0xff]
    %s900 = scalar_lea.vmem [#allocation2], 288
    %v901 = vld [vmem:[%s900] ss:$2 sm:$0x1f]
    %s902 = scalar_lea.vmem [#allocation2], 1
    %v903 = vld [vmem:[%s902] ss:$2 sm:$0xff]
    %s904 = scalar_lea.vmem [#allocation2], 17
    %v905 = vld [vmem:[%s904] ss:$2 sm:$0xff]
    %s906 = scalar_lea.vmem [#allocation2], 33
    %v907 = vld [vmem:[%s906] ss:$2 sm:$0xff]
    %s908 = scalar_lea.vmem [#allocation2], 49
    %v909 = vld [vmem:[%s908] ss:$2 sm:$0xff]
    %s910 = scalar_lea.vmem [#allocation2], 65
    %v911 = vld [vmem:[%s910] ss:$2 sm:$0xff]
    %s912 = scalar_lea.vmem [#allocation2], 81
    %v913 = vld [vmem:[%s912] ss:$2 sm:$0xff]
    %s914 = scalar_lea.vmem [#allocation2], 97
    %v915 = vld [vmem:[%s914] ss:$2 sm:$0xff]
    %s916 = scalar_lea.vmem [#allocation2], 113
    %v917 = vld [vmem:[%s916] ss:$2 sm:$0xff]
    %s918 = scalar_lea.vmem [#allocation2], 129
    %v919 = vld [vmem:[%s918] ss:$2 sm:$0xff]
    %s920 = scalar_lea.vmem [#allocation2], 145
    %v921 = vld [vmem:[%s920] ss:$2 sm:$0xff]
    %s922 = scalar_lea.vmem [#allocation2], 161
    %v923 = vld [vmem:[%s922] ss:$2 sm:$0xff]
    %s924 = scalar_lea.vmem [#allocation2], 177
    %v925 = vld [vmem:[%s924] ss:$2 sm:$0xff]
    %s926 = scalar_lea.vmem [#allocation2], 193
    %v927 = vld [vmem:[%s926] ss:$2 sm:$0xff]
    %s928 = scalar_lea.vmem [#allocation2], 209
    %v929 = vld [vmem:[%s928] ss:$2 sm:$0xff]
    %s930 = scalar_lea.vmem [#allocation2], 225
    %v931 = vld [vmem:[%s930] ss:$2 sm:$0xff]
    %s932 = scalar_lea.vmem [#allocation2], 241
    %v933 = vld [vmem:[%s932] ss:$2 sm:$0xff]
    %s934 = scalar_lea.vmem [#allocation2], 257
    %v935 = vld [vmem:[%s934] ss:$2 sm:$0xff]
    %s936 = scalar_lea.vmem [#allocation2], 273
    %v937 = vld [vmem:[%s936] ss:$2 sm:$0xff]
    %s938 = scalar_lea.vmem [#allocation2], 289
    %v939 = vld [vmem:[%s938] ss:$2 sm:$0x1f]
    %v940 = vmax.f32 %v865, %v903
    %v941 = vmax.f32 %v867, %v905
    %v942 = vmax.f32 %v869, %v907
    %v943 = vmax.f32 %v871, %v909
    %v944 = vmax.f32 %v873, %v911
    %v945 = vmax.f32 %v875, %v913
    %v946 = vmax.f32 %v877, %v915
    %v947 = vmax.f32 %v879, %v917
    %v948 = vmax.f32 %v881, %v919
    %v949 = vmax.f32 %v883, %v921
    %v950 = vmax.f32 %v885, %v923
    %v951 = vmax.f32 %v887, %v925
    %v952 = vmax.f32 %v889, %v927
    %v953 = vmax.f32 %v891, %v929
    %v954 = vmax.f32 %v893, %v931
    %v955 = vmax.f32 %v895, %v933
    %v956 = vmax.f32 %v897, %v935
    %v957 = vmax.f32 %v899, %v937
    %v958 = vmax.f32 %v901, %v939
    %vm978 = vcmask 1046528
    %v979 = vrot.slane %v940, 1
    %v980 = vrot.slane %v941, 1
    %v981 = vsel %vm978, %v979, %v980
    %v982 = vrot.slane %v942, 1
    %v983 = vsel %vm978, %v980, %v982
    %v984 = vrot.slane %v943, 1
    %v985 = vsel %vm978, %v982, %v984
    %v986 = vrot.slane %v944, 1
    %v987 = vsel %vm978, %v984, %v986
    %v988 = vrot.slane %v945, 1
    %v989 = vsel %vm978, %v986, %v988
    %v990 = vrot.slane %v946, 1
    %v991 = vsel %vm978, %v988, %v990
    %v992 = vrot.slane %v947, 1
    %v993 = vsel %vm978, %v990, %v992
    %v994 = vrot.slane %v948, 1
    %v995 = vsel %vm978, %v992, %v994
    %v996 = vrot.slane %v949, 1
    %v997 = vsel %vm978, %v994, %v996
    %v998 = vrot.slane %v950, 1
    %v999 = vsel %vm978, %v996, %v998
    %v1000 = vrot.slane %v951, 1
    %v1001 = vsel %vm978, %v998, %v1000
    %v1002 = vrot.slane %v952, 1
    %v1003 = vsel %vm978, %v1000, %v1002
    %v1004 = vrot.slane %v953, 1
    %v1005 = vsel %vm978, %v1002, %v1004
    %v1006 = vrot.slane %v954, 1
    %v1007 = vsel %vm978, %v1004, %v1006
    %v1008 = vrot.slane %v955, 1
    %v1009 = vsel %vm978, %v1006, %v1008
    %v1010 = vrot.slane %v956, 1
    %v1011 = vsel %vm978, %v1008, %v1010
    %v1012 = vrot.slane %v957, 1
    %v1013 = vsel %vm978, %v1010, %v1012
    %v1014 = vrot.slane %v958, 1
    %v1015 = vsel %vm978, %v1012, %v1014
    %1016 = vrot.lane.b32.xlu0 %v981, 10
    %v1017 = vpop.permute.xlu0 %1016
    %1018 = vrot.lane.b32.xlu0 %v983, 10
    %v1019 = vpop.permute.xlu0 %1018
    %1020 = vrot.lane.b32.xlu0 %v985, 10
    %v1021 = vpop.permute.xlu0 %1020
    %1022 = vrot.lane.b32.xlu0 %v987, 10
    %v1023 = vpop.permute.xlu0 %1022
    %1024 = vrot.lane.b32.xlu0 %v989, 10
    %v1025 = vpop.permute.xlu0 %1024
    %1026 = vrot.lane.b32.xlu0 %v991, 10
    %v1027 = vpop.permute.xlu0 %1026
    %1028 = vrot.lane.b32.xlu0 %v993, 10
    %v1029 = vpop.permute.xlu0 %1028
    %1030 = vrot.lane.b32.xlu0 %v995, 10
    %v1031 = vpop.permute.xlu0 %1030
    %1032 = vrot.lane.b32.xlu0 %v997, 10
    %v1033 = vpop.permute.xlu0 %1032
    %1034 = vrot.lane.b32.xlu0 %v999, 10
    %v1035 = vpop.permute.xlu0 %1034
    %1036 = vrot.lane.b32.xlu0 %v1001, 10
    %v1037 = vpop.permute.xlu0 %1036
    %1038 = vrot.lane.b32.xlu0 %v1003, 10
    %v1039 = vpop.permute.xlu0 %1038
    %1040 = vrot.lane.b32.xlu0 %v1005, 10
    %v1041 = vpop.permute.xlu0 %1040
    %1042 = vrot.lane.b32.xlu0 %v1007, 10
    %v1043 = vpop.permute.xlu0 %1042
    %1044 = vrot.lane.b32.xlu0 %v1009, 10
    %v1045 = vpop.permute.xlu0 %1044
    %1046 = vrot.lane.b32.xlu0 %v1011, 10
    %v1047 = vpop.permute.xlu0 %1046
    %1048 = vrot.lane.b32.xlu0 %v1013, 10
    %v1049 = vpop.permute.xlu0 %1048
    %1050 = vrot.lane.b32.xlu0 %v1015, 10
    %v1051 = vpop.permute.xlu0 %1050
    %1052 = vrot.lane.b32.xlu0 %v1014, 10
    %v1053 = vpop.permute.xlu0 %1052
    %v1073 = vrot.slane %v940, 2
    %v1074 = vrot.slane %v941, 2
    %v1075 = vsel %vm652, %v1073, %v1074
    %v1076 = vrot.slane %v942, 2
    %v1077 = vsel %vm652, %v1074, %v1076
    %v1078 = vrot.slane %v943, 2
    %v1079 = vsel %vm652, %v1076, %v1078
    %v1080 = vrot.slane %v944, 2
    %v1081 = vsel %vm652, %v1078, %v1080
    %v1082 = vrot.slane %v945, 2
    %v1083 = vsel %vm652, %v1080, %v1082
    %v1084 = vrot.slane %v946, 2
    %v1085 = vsel %vm652, %v1082, %v1084
    %v1086 = vrot.slane %v947, 2
    %v1087 = vsel %vm652, %v1084, %v1086
    %v1088 = vrot.slane %v948, 2
    %v1089 = vsel %vm652, %v1086, %v1088
    %v1090 = vrot.slane %v949, 2
    %v1091 = vsel %vm652, %v1088, %v1090
    %v1092 = vrot.slane %v950, 2
    %v1093 = vsel %vm652, %v1090, %v1092
    %v1094 = vrot.slane %v951, 2
    %v1095 = vsel %vm652, %v1092, %v1094
    %v1096 = vrot.slane %v952, 2
    %v1097 = vsel %vm652, %v1094, %v1096
    %v1098 = vrot.slane %v953, 2
    %v1099 = vsel %vm652, %v1096, %v1098
    %v1100 = vrot.slane %v954, 2
    %v1101 = vsel %vm652, %v1098, %v1100
    %v1102 = vrot.slane %v955, 2
    %v1103 = vsel %vm652, %v1100, %v1102
    %v1104 = vrot.slane %v956, 2
    %v1105 = vsel %vm652, %v1102, %v1104
    %v1106 = vrot.slane %v957, 2
    %v1107 = vsel %vm652, %v1104, %v1106
    %v1108 = vrot.slane %v958, 2
    %v1109 = vsel %vm652, %v1106, %v1108
    %1110 = vrot.lane.b32.xlu0 %v1075, 20
    %v1111 = vpop.permute.xlu0 %1110
    %1112 = vrot.lane.b32.xlu0 %v1077, 20
    %v1113 = vpop.permute.xlu0 %1112
    %1114 = vrot.lane.b32.xlu0 %v1079, 20
    %v1115 = vpop.permute.xlu0 %1114
    %1116 = vrot.lane.b32.xlu0 %v1081, 20
    %v1117 = vpop.permute.xlu0 %1116
    %1118 = vrot.lane.b32.xlu0 %v1083, 20
    %v1119 = vpop.permute.xlu0 %1118
    %1120 = vrot.lane.b32.xlu0 %v1085, 20
    %v1121 = vpop.permute.xlu0 %1120
    %1122 = vrot.lane.b32.xlu0 %v1087, 20
    %v1123 = vpop.permute.xlu0 %1122
    %1124 = vrot.lane.b32.xlu0 %v1089, 20
    %v1125 = vpop.permute.xlu0 %1124
    %1126 = vrot.lane.b32.xlu0 %v1091, 20
    %v1127 = vpop.permute.xlu0 %1126
    %1128 = vrot.lane.b32.xlu0 %v1093, 20
    %v1129 = vpop.permute.xlu0 %1128
    %1130 = vrot.lane.b32.xlu0 %v1095, 20
    %v1131 = vpop.permute.xlu0 %1130
    %1132 = vrot.lane.b32.xlu0 %v1097, 20
    %v1133 = vpop.permute.xlu0 %1132
    %1134 = vrot.lane.b32.xlu0 %v1099, 20
    %v1135 = vpop.permute.xlu0 %1134
    %1136 = vrot.lane.b32.xlu0 %v1101, 20
    %v1137 = vpop.permute.xlu0 %1136
    %1138 = vrot.lane.b32.xlu0 %v1103, 20
    %v1139 = vpop.permute.xlu0 %1138
    %1140 = vrot.lane.b32.xlu0 %v1105, 20
    %v1141 = vpop.permute.xlu0 %1140
    %1142 = vrot.lane.b32.xlu0 %v1107, 20
    %v1143 = vpop.permute.xlu0 %1142
    %1144 = vrot.lane.b32.xlu0 %v1109, 20
    %v1145 = vpop.permute.xlu0 %1144
    %1146 = vrot.lane.b32.xlu0 %v1108, 20
    %v1147 = vpop.permute.xlu0 %1146
    %vm1167 = vcmask 1044480
    %v1168 = vrot.slane %v940, 3
    %v1169 = vrot.slane %v941, 3
    %v1170 = vsel %vm1167, %v1168, %v1169
    %v1171 = vrot.slane %v942, 3
    %v1172 = vsel %vm1167, %v1169, %v1171
    %v1173 = vrot.slane %v943, 3
    %v1174 = vsel %vm1167, %v1171, %v1173
    %v1175 = vrot.slane %v944, 3
    %v1176 = vsel %vm1167, %v1173, %v1175
    %v1177 = vrot.slane %v945, 3
    %v1178 = vsel %vm1167, %v1175, %v1177
    %v1179 = vrot.slane %v946, 3
    %v1180 = vsel %vm1167, %v1177, %v1179
    %v1181 = vrot.slane %v947, 3
    %v1182 = vsel %vm1167, %v1179, %v1181
    %v1183 = vrot.slane %v948, 3
    %v1184 = vsel %vm1167, %v1181, %v1183
    %v1185 = vrot.slane %v949, 3
    %v1186 = vsel %vm1167, %v1183, %v1185
    %v1187 = vrot.slane %v950, 3
    %v1188 = vsel %vm1167, %v1185, %v1187
    %v1189 = vrot.slane %v951, 3
    %v1190 = vsel %vm1167, %v1187, %v1189
    %v1191 = vrot.slane %v952, 3
    %v1192 = vsel %vm1167, %v1189, %v1191
    %v1193 = vrot.slane %v953, 3
    %v1194 = vsel %vm1167, %v1191, %v1193
    %v1195 = vrot.slane %v954, 3
    %v1196 = vsel %vm1167, %v1193, %v1195
    %v1197 = vrot.slane %v955, 3
    %v1198 = vsel %vm1167, %v1195, %v1197
    %v1199 = vrot.slane %v956, 3
    %v1200 = vsel %vm1167, %v1197, %v1199
    %v1201 = vrot.slane %v957, 3
    %v1202 = vsel %vm1167, %v1199, %v1201
    %v1203 = vrot.slane %v958, 3
    %v1204 = vsel %vm1167, %v1201, %v1203
    %1205 = vrot.lane.b32.xlu0 %v1170, 30
    %v1206 = vpop.permute.xlu0 %1205
    %1207 = vrot.lane.b32.xlu0 %v1172, 30
    %v1208 = vpop.permute.xlu0 %1207
    %1209 = vrot.lane.b32.xlu0 %v1174, 30
    %v1210 = vpop.permute.xlu0 %1209
    %1211 = vrot.lane.b32.xlu0 %v1176, 30
    %v1212 = vpop.permute.xlu0 %1211
    %1213 = vrot.lane.b32.xlu0 %v1178, 30
    %v1214 = vpop.permute.xlu0 %1213
    %1215 = vrot.lane.b32.xlu0 %v1180, 30
    %v1216 = vpop.permute.xlu0 %1215
    %1217 = vrot.lane.b32.xlu0 %v1182, 30
    %v1218 = vpop.permute.xlu0 %1217
    %1219 = vrot.lane.b32.xlu0 %v1184, 30
    %v1220 = vpop.permute.xlu0 %1219
    %1221 = vrot.lane.b32.xlu0 %v1186, 30
    %v1222 = vpop.permute.xlu0 %1221
    %1223 = vrot.lane.b32.xlu0 %v1188, 30
    %v1224 = vpop.permute.xlu0 %1223
    %1225 = vrot.lane.b32.xlu0 %v1190, 30
    %v1226 = vpop.permute.xlu0 %1225
    %1227 = vrot.lane.b32.xlu0 %v1192, 30
    %v1228 = vpop.permute.xlu0 %1227
    %1229 = vrot.lane.b32.xlu0 %v1194, 30
    %v1230 = vpop.permute.xlu0 %1229
    %1231 = vrot.lane.b32.xlu0 %v1196, 30
    %v1232 = vpop.permute.xlu0 %1231
    %1233 = vrot.lane.b32.xlu0 %v1198, 30
    %v1234 = vpop.permute.xlu0 %1233
    %1235 = vrot.lane.b32.xlu0 %v1200, 30
    %v1236 = vpop.permute.xlu0 %1235
    %1237 = vrot.lane.b32.xlu0 %v1202, 30
    %v1238 = vpop.permute.xlu0 %1237
    %1239 = vrot.lane.b32.xlu0 %v1204, 30
    %v1240 = vpop.permute.xlu0 %1239
    %1241 = vrot.lane.b32.xlu0 %v1203, 30
    %v1242 = vpop.permute.xlu0 %1241
    %v1262 = vsel %vm825, %v940, %v1017
    %v1263 = vsel %vm825, %v941, %v1019
    %v1264 = vsel %vm825, %v942, %v1021
    %v1265 = vsel %vm825, %v943, %v1023
    %v1266 = vsel %vm825, %v944, %v1025
    %v1267 = vsel %vm825, %v945, %v1027
    %v1268 = vsel %vm825, %v946, %v1029
    %v1269 = vsel %vm825, %v947, %v1031
    %v1270 = vsel %vm825, %v948, %v1033
    %v1271 = vsel %vm825, %v949, %v1035
    %v1272 = vsel %vm825, %v950, %v1037
    %v1273 = vsel %vm825, %v951, %v1039
    %v1274 = vsel %vm825, %v952, %v1041
    %v1275 = vsel %vm825, %v953, %v1043
    %v1276 = vsel %vm825, %v954, %v1045
    %v1277 = vsel %vm825, %v955, %v1047
    %v1278 = vsel %vm825, %v956, %v1049
    %v1279 = vsel %vm825, %v957, %v1051
    %v1280 = vsel %vm825, %v958, %v1053
    %vm1281 = vcmask 162816
    %v1282 = vsel %vm1281, %v1262, %v1111
    %v1283 = vsel %vm1281, %v1263, %v1113
    %v1284 = vsel %vm1281, %v1264, %v1115
    %v1285 = vsel %vm1281, %v1265, %v1117
    %v1286 = vsel %vm1281, %v1266, %v1119
    %v1287 = vsel %vm1281, %v1267, %v1121
    %v1288 = vsel %vm1281, %v1268, %v1123
    %v1289 = vsel %vm1281, %v1269, %v1125
    %v1290 = vsel %vm1281, %v1270, %v1127
    %v1291 = vsel %vm1281, %v1271, %v1129
    %v1292 = vsel %vm1281, %v1272, %v1131
    %v1293 = vsel %vm1281, %v1273, %v1133
    %v1294 = vsel %vm1281, %v1274, %v1135
    %v1295 = vsel %vm1281, %v1275, %v1137
    %v1296 = vsel %vm1281, %v1276, %v1139
    %v1297 = vsel %vm1281, %v1277, %v1141
    %v1298 = vsel %vm1281, %v1278, %v1143
    %v1299 = vsel %vm1281, %v1279, %v1145
    %v1300 = vsel %vm1281, %v1280, %v1147
    %vm1301 = vcmask 244736
    %v1302 = vsel %vm1301, %v1282, %v1206
    %v1303 = vsel %vm1301, %v1283, %v1208
    %v1304 = vsel %vm1301, %v1284, %v1210
    %v1305 = vsel %vm1301, %v1285, %v1212
    %v1306 = vsel %vm1301, %v1286, %v1214
    %v1307 = vsel %vm1301, %v1287, %v1216
    %v1308 = vsel %vm1301, %v1288, %v1218
    %v1309 = vsel %vm1301, %v1289, %v1220
    %v1310 = vsel %vm1301, %v1290, %v1222
    %v1311 = vsel %vm1301, %v1291, %v1224
    %v1312 = vsel %vm1301, %v1292, %v1226
    %v1313 = vsel %vm1301, %v1293, %v1228
    %v1314 = vsel %vm1301, %v1294, %v1230
    %v1315 = vsel %vm1301, %v1295, %v1232
    %v1316 = vsel %vm1301, %v1296, %v1234
    %v1317 = vsel %vm1301, %v1297, %v1236
    %v1318 = vsel %vm1301, %v1298, %v1238
    %v1319 = vsel %vm1301, %v1299, %v1240
    %v1320 = vsel %vm1301, %v1300, %v1242
    %v1321 = vld [vmem:[%s3] sm:$0xff]
    %v1322 = vld [vmem:[%s3 + $0x8] sm:$0xff]
    %v1323 = vld [vmem:[%s3 + $0x10] sm:$0xff]
    %v1324 = vld [vmem:[%s3 + $0x18] sm:$0xff]
    %v1325 = vld [vmem:[%s3 + $0x20] sm:$0xff]
    %v1326 = vld [vmem:[%s4] sm:$0x1]
    %v1328 = vperm.slane %v1326, 0
    %vm1330 = vcmask 326656
    %v1332 = vsel %vm1330, %v1302, 0
    %v1335 = vsel %vm1330, %v1303, 0
    %v1338 = vsel %vm1330, %v1304, 0
    %v1341 = vsel %vm1330, %v1305, 0
    %v1344 = vsel %vm1330, %v1306, 0
    %v1347 = vsel %vm1330, %v1307, 0
    %v1350 = vsel %vm1330, %v1308, 0
    %v1353 = vsel %vm1330, %v1309, 0
    %v1356 = vsel %vm1330, %v1310, 0
    %v1359 = vsel %vm1330, %v1311, 0
    %v1362 = vsel %vm1330, %v1312, 0
    %v1365 = vsel %vm1330, %v1313, 0
    %v1368 = vsel %vm1330, %v1314, 0
    %v1371 = vsel %vm1330, %v1315, 0
    %v1374 = vsel %vm1330, %v1316, 0
    %v1377 = vsel %vm1330, %v1317, 0
    %v1380 = vsel %vm1330, %v1318, 0
    %v1383 = vsel %vm1330, %v1319, 0
    %v1386 = vsel %vm1330, %v1320, 0
    %1388 = vmatpush.msra.mxu0 0.0
    %1389 = vmatpush.msra.mxu0 0.0
    %1390 = vmatpush.msra.mxu0 0.0
    %1391 = vmatpush.msra.mxu0 0.0
    %1392 = vmatpush.msra.mxu0 0.0
    %1393 = vmatpush.msra.mxu0 0.0
    %1394 = vmatpush.msra.mxu0 0.0
    %1395 = vmatpush.msra.mxu0 0.0
    %1396 = vmatpush.msra.mxu0 0.0
    %1397 = vmatpush.msra.mxu0 0.0
    %1398 = vmatpush.msra.mxu0 0.0
    %1399 = vmatpush.msra.mxu0 %v1325
    %1400 = vmatpush.msra.mxu0 %v1324
    %1401 = vmatpush.msra.mxu0 %v1323
    %1402 = vmatpush.msra.mxu0 %v1322
    %1403 = vmatpush.msra.mxu0 %v1321
    %1404 = vmatmul.f32.gmra.mxu0 %v1332
    %v1405 = vpop.f32.mrf.mxu0
    %v1406 = vadd.f32 %v1328, %v1405
    %1407 = vmatmul.f32.gmra.mxu0 %v1335
    %v1408 = vpop.f32.mrf.mxu0
    %v1409 = vadd.f32 %v1328, %v1408
    %1410 = vmatmul.f32.gmra.mxu0 %v1338
    %v1411 = vpop.f32.mrf.mxu0
    %v1412 = vadd.f32 %v1328, %v1411
    %1413 = vmatmul.f32.gmra.mxu0 %v1341
    %v1414 = vpop.f32.mrf.mxu0
    %v1415 = vadd.f32 %v1328, %v1414
    %1416 = vmatmul.f32.gmra.mxu0 %v1344
    %v1417 = vpop.f32.mrf.mxu0
    %v1418 = vadd.f32 %v1328, %v1417
    %1419 = vmatmul.f32.gmra.mxu0 %v1347
    %v1420 = vpop.f32.mrf.mxu0
    %v1421 = vadd.f32 %v1328, %v1420
    %1422 = vmatmul.f32.gmra.mxu0 %v1350
    %v1423 = vpop.f32.mrf.mxu0
    %v1424 = vadd.f32 %v1328, %v1423
    %1425 = vmatmul.f32.gmra.mxu0 %v1353
    %v1426 = vpop.f32.mrf.mxu0
    %v1427 = vadd.f32 %v1328, %v1426
    %1428 = vmatmul.f32.gmra.mxu0 %v1356
    %v1429 = vpop.f32.mrf.mxu0
    %v1430 = vadd.f32 %v1328, %v1429
    %1431 = vmatmul.f32.gmra.mxu0 %v1359
    %v1432 = vpop.f32.mrf.mxu0
    %v1433 = vadd.f32 %v1328, %v1432
    %1434 = vmatmul.f32.gmra.mxu0 %v1362
    %v1435 = vpop.f32.mrf.mxu0
    %v1436 = vadd.f32 %v1328, %v1435
    %1437 = vmatmul.f32.gmra.mxu0 %v1365
    %v1438 = vpop.f32.mrf.mxu0
    %v1439 = vadd.f32 %v1328, %v1438
    %1440 = vmatmul.f32.gmra.mxu0 %v1368
    %v1441 = vpop.f32.mrf.mxu0
    %v1442 = vadd.f32 %v1328, %v1441
    %1443 = vmatmul.f32.gmra.mxu0 %v1371
    %v1444 = vpop.f32.mrf.mxu0
    %v1445 = vadd.f32 %v1328, %v1444
    %1446 = vmatmul.f32.gmra.mxu0 %v1374
    %v1447 = vpop.f32.mrf.mxu0
    %v1448 = vadd.f32 %v1328, %v1447
    %1449 = vmatmul.f32.gmra.mxu0 %v1377
    %v1450 = vpop.f32.mrf.mxu0
    %v1451 = vadd.f32 %v1328, %v1450
    %1452 = vmatmul.f32.gmra.mxu0 %v1380
    %v1453 = vpop.f32.mrf.mxu0
    %v1454 = vadd.f32 %v1328, %v1453
    %1455 = vmatmul.f32.gmra.mxu0 %v1383
    %v1456 = vpop.f32.mrf.mxu0
    %v1457 = vadd.f32 %v1328, %v1456
    %1458 = vmatmul.f32.gmra.mxu0 %v1386
    %v1459 = vpop.f32.mrf.mxu0
    %v1460 = vadd.f32 %v1328, %v1459
    %1461 = vdwg.mxu0
    %v1462 = vmax.f32 %v1406, 0.0
    %v1463 = vmax.f32 %v1409, 0.0
    %v1464 = vmax.f32 %v1412, 0.0
    %v1465 = vmax.f32 %v1415, 0.0
    %v1466 = vmax.f32 %v1418, 0.0
    %v1467 = vmax.f32 %v1421, 0.0
    %v1468 = vmax.f32 %v1424, 0.0
    %v1469 = vmax.f32 %v1427, 0.0
    %v1470 = vmax.f32 %v1430, 0.0
    %v1471 = vmax.f32 %v1433, 0.0
    %v1472 = vmax.f32 %v1436, 0.0
    %v1473 = vmax.f32 %v1439, 0.0
    %v1474 = vmax.f32 %v1442, 0.0
    %v1475 = vmax.f32 %v1445, 0.0
    %v1476 = vmax.f32 %v1448, 0.0
    %v1477 = vmax.f32 %v1451, 0.0
    %v1478 = vmax.f32 %v1454, 0.0
    %v1479 = vmax.f32 %v1457, 0.0
    %v1480 = vmax.f32 %v1460, 0.0
    %1481 = vst.msk [vmem:[#allocation3] sm:$0xff] %vm1281, %v1462
    %1482 = vst.msk [vmem:[#allocation3 + $0x8] sm:$0xff] %vm1281, %v1463
    %1483 = vst.msk [vmem:[#allocation3 + $0x10] sm:$0xff] %vm1281, %v1464
    %1484 = vst.msk [vmem:[#allocation3 + $0x18] sm:$0xff] %vm1281, %v1465
    %1485 = vst.msk [vmem:[#allocation3 + $0x20] sm:$0xff] %vm1281, %v1466
    %1486 = vst.msk [vmem:[#allocation3 + $0x28] sm:$0xff] %vm1281, %v1467
    %1487 = vst.msk [vmem:[#allocation3 + $0x30] sm:$0xff] %vm1281, %v1468
    %1488 = vst.msk [vmem:[#allocation3 + $0x38] sm:$0xff] %vm1281, %v1469
    %1489 = vst.msk [vmem:[#allocation3 + $0x40] sm:$0xff] %vm1281, %v1470
    %1490 = vst.msk [vmem:[#allocation3 + $0x48] sm:$0xff] %vm1281, %v1471
    %1491 = vst.msk [vmem:[#allocation3 + $0x50] sm:$0xff] %vm1281, %v1472
    %1492 = vst.msk [vmem:[#allocation3 + $0x58] sm:$0xff] %vm1281, %v1473
    %1493 = vst.msk [vmem:[#allocation3 + $0x60] sm:$0xff] %vm1281, %v1474
    %1494 = vst.msk [vmem:[#allocation3 + $0x68] sm:$0xff] %vm1281, %v1475
    %1495 = vst.msk [vmem:[#allocation3 + $0x70] sm:$0xff] %vm1281, %v1476
    %1496 = vst.msk [vmem:[#allocation3 + $0x78] sm:$0xff] %vm1281, %v1477
    %1497 = vst.msk [vmem:[#allocation3 + $0x80] sm:$0xff] %vm1281, %v1478
    %1498 = vst.msk [vmem:[#allocation3 + $0x88] sm:$0xff] %vm1281, %v1479
    %vm1499 = vcmask 156672
    %1500 = vst.msk [vmem:[#allocation3 + $0x90] sm:$0x3] %vm1499, %v1480
    %v1501 = vld [vmem:[#allocation3] ss:$2 sm:$0xff]
    %s1502 = scalar_lea.vmem [#allocation3], 16
    %v1503 = vld [vmem:[%s1502] ss:$2 sm:$0xff]
    %s1504 = scalar_lea.vmem [#allocation3], 32
    %v1505 = vld [vmem:[%s1504] ss:$2 sm:$0xff]
    %s1506 = scalar_lea.vmem [#allocation3], 48
    %v1507 = vld [vmem:[%s1506] ss:$2 sm:$0xff]
    %s1508 = scalar_lea.vmem [#allocation3], 64
    %v1509 = vld [vmem:[%s1508] ss:$2 sm:$0xff]
    %s1510 = scalar_lea.vmem [#allocation3], 80
    %v1511 = vld [vmem:[%s1510] ss:$2 sm:$0xff]
    %s1512 = scalar_lea.vmem [#allocation3], 96
    %v1513 = vld [vmem:[%s1512] ss:$2 sm:$0xff]
    %s1514 = scalar_lea.vmem [#allocation3], 112
    %v1515 = vld [vmem:[%s1514] ss:$2 sm:$0xff]
    %s1516 = scalar_lea.vmem [#allocation3], 128
    %v1517 = vld [vmem:[%s1516] ss:$2 sm:$0xff]
    %s1518 = scalar_lea.vmem [#allocation3], 144
    %v1519 = vld [vmem:[%s1518] ss:$2 sm:$0x1]
    %s1520 = scalar_lea.vmem [#allocation3], 1
    %v1521 = vld [vmem:[%s1520] ss:$2 sm:$0xff]
    %s1522 = scalar_lea.vmem [#allocation3], 17
    %v1523 = vld [vmem:[%s1522] ss:$2 sm:$0xff]
    %s1524 = scalar_lea.vmem [#allocation3], 33
    %v1525 = vld [vmem:[%s1524] ss:$2 sm:$0xff]
    %s1526 = scalar_lea.vmem [#allocation3], 49
    %v1527 = vld [vmem:[%s1526] ss:$2 sm:$0xff]
    %s1528 = scalar_lea.vmem [#allocation3], 65
    %v1529 = vld [vmem:[%s1528] ss:$2 sm:$0xff]
    %s1530 = scalar_lea.vmem [#allocation3], 81
    %v1531 = vld [vmem:[%s1530] ss:$2 sm:$0xff]
    %s1532 = scalar_lea.vmem [#allocation3], 97
    %v1533 = vld [vmem:[%s1532] ss:$2 sm:$0xff]
    %s1534 = scalar_lea.vmem [#allocation3], 113
    %v1535 = vld [vmem:[%s1534] ss:$2 sm:$0xff]
    %s1536 = scalar_lea.vmem [#allocation3], 129
    %v1537 = vld [vmem:[%s1536] ss:$2 sm:$0xff]
    %s1538 = scalar_lea.vmem [#allocation3], 145
    %v1539 = vld [vmem:[%s1538] ss:$2 sm:$0x1]
    %v1540 = vmax.f32 %v1501, %v1521
    %v1541 = vmax.f32 %v1503, %v1523
    %v1542 = vmax.f32 %v1505, %v1525
    %v1543 = vmax.f32 %v1507, %v1527
    %v1544 = vmax.f32 %v1509, %v1529
    %v1545 = vmax.f32 %v1511, %v1531
    %v1546 = vmax.f32 %v1513, %v1533
    %v1547 = vmax.f32 %v1515, %v1535
    %v1548 = vmax.f32 %v1517, %v1537
    %v1549 = vmax.f32 %v1519, %v1539
    %v1559 = vrot.slane %v1540, 1
    %v1560 = vrot.slane %v1541, 1
    %v1561 = vsel %vm978, %v1559, %v1560
    %v1562 = vrot.slane %v1542, 1
    %v1563 = vsel %vm978, %v1560, %v1562
    %v1564 = vrot.slane %v1543, 1
    %v1565 = vsel %vm978, %v1562, %v1564
    %v1566 = vrot.slane %v1544, 1
    %v1567 = vsel %vm978, %v1564, %v1566
    %v1568 = vrot.slane %v1545, 1
    %v1569 = vsel %vm978, %v1566, %v1568
    %v1570 = vrot.slane %v1546, 1
    %v1571 = vsel %vm978, %v1568, %v1570
    %v1572 = vrot.slane %v1547, 1
    %v1573 = vsel %vm978, %v1570, %v1572
    %v1574 = vrot.slane %v1548, 1
    %v1575 = vsel %vm978, %v1572, %v1574
    %1576 = vrot.lane.b32.xlu0 %v1561, 20
    %v1577 = vpop.permute.xlu0 %1576
    %1578 = vrot.lane.b32.xlu0 %v1563, 20
    %v1579 = vpop.permute.xlu0 %1578
    %1580 = vrot.lane.b32.xlu0 %v1565, 20
    %v1581 = vpop.permute.xlu0 %1580
    %1582 = vrot.lane.b32.xlu0 %v1567, 20
    %v1583 = vpop.permute.xlu0 %1582
    %1584 = vrot.lane.b32.xlu0 %v1569, 20
    %v1585 = vpop.permute.xlu0 %1584
    %1586 = vrot.lane.b32.xlu0 %v1571, 20
    %v1587 = vpop.permute.xlu0 %1586
    %1588 = vrot.lane.b32.xlu0 %v1573, 20
    %v1589 = vpop.permute.xlu0 %1588
    %1590 = vrot.lane.b32.xlu0 %v1575, 20
    %v1591 = vpop.permute.xlu0 %1590
    %1592 = vrot.lane.b32.xlu0 %v1574, 20
    %v1593 = vpop.permute.xlu0 %1592
    %v1603 = vrot.slane %v1540, 2
    %v1604 = vrot.slane %v1541, 2
    %v1605 = vsel %vm652, %v1603, %v1604
    %v1606 = vrot.slane %v1542, 2
    %v1607 = vsel %vm652, %v1604, %v1606
    %v1608 = vrot.slane %v1543, 2
    %v1609 = vsel %vm652, %v1606, %v1608
    %v1610 = vrot.slane %v1544, 2
    %v1611 = vsel %vm652, %v1608, %v1610
    %v1612 = vrot.slane %v1545, 2
    %v1613 = vsel %vm652, %v1610, %v1612
    %v1614 = vrot.slane %v1546, 2
    %v1615 = vsel %vm652, %v1612, %v1614
    %v1616 = vrot.slane %v1547, 2
    %v1617 = vsel %vm652, %v1614, %v1616
    %v1618 = vrot.slane %v1548, 2
    %v1619 = vsel %vm652, %v1616, %v1618
    %1620 = vrot.lane.b32.xlu0 %v1605, 40
    %v1621 = vpop.permute.xlu0 %1620
    %1622 = vrot.lane.b32.xlu0 %v1607, 40
    %v1623 = vpop.permute.xlu0 %1622
    %1624 = vrot.lane.b32.xlu0 %v1609, 40
    %v1625 = vpop.permute.xlu0 %1624
    %1626 = vrot.lane.b32.xlu0 %v1611, 40
    %v1627 = vpop.permute.xlu0 %1626
    %1628 = vrot.lane.b32.xlu0 %v1613, 40
    %v1629 = vpop.permute.xlu0 %1628
    %1630 = vrot.lane.b32.xlu0 %v1615, 40
    %v1631 = vpop.permute.xlu0 %1630
    %1632 = vrot.lane.b32.xlu0 %v1617, 40
    %v1633 = vpop.permute.xlu0 %1632
    %1634 = vrot.lane.b32.xlu0 %v1619, 40
    %v1635 = vpop.permute.xlu0 %1634
    %1636 = vrot.lane.b32.xlu0 %v1618, 40
    %v1637 = vpop.permute.xlu0 %1636
    %v1648 = vrot.slane %v1540, 3
    %v1649 = vrot.slane %v1541, 3
    %v1650 = vsel %vm1167, %v1648, %v1649
    %v1651 = vrot.slane %v1542, 3
    %v1652 = vsel %vm1167, %v1649, %v1651
    %v1653 = vrot.slane %v1543, 3
    %v1654 = vsel %vm1167, %v1651, %v1653
    %v1655 = vrot.slane %v1544, 3
    %v1656 = vsel %vm1167, %v1653, %v1655
    %v1657 = vrot.slane %v1545, 3
    %v1658 = vsel %vm1167, %v1655, %v1657
    %v1659 = vrot.slane %v1546, 3
    %v1660 = vsel %vm1167, %v1657, %v1659
    %v1661 = vrot.slane %v1547, 3
    %v1662 = vsel %vm1167, %v1659, %v1661
    %v1663 = vrot.slane %v1548, 3
    %v1664 = vsel %vm1167, %v1661, %v1663
    %v1665 = vrot.slane %v1549, 3
    %v1666 = vsel %vm1167, %v1663, %v1665
    %1667 = vrot.lane.b32.xlu0 %v1650, 60
    %v1668 = vpop.permute.xlu0 %1667
    %1669 = vrot.lane.b32.xlu0 %v1652, 60
    %v1670 = vpop.permute.xlu0 %1669
    %1671 = vrot.lane.b32.xlu0 %v1654, 60
    %v1672 = vpop.permute.xlu0 %1671
    %1673 = vrot.lane.b32.xlu0 %v1656, 60
    %v1674 = vpop.permute.xlu0 %1673
    %1675 = vrot.lane.b32.xlu0 %v1658, 60
    %v1676 = vpop.permute.xlu0 %1675
    %1677 = vrot.lane.b32.xlu0 %v1660, 60
    %v1678 = vpop.permute.xlu0 %1677
    %1679 = vrot.lane.b32.xlu0 %v1662, 60
    %v1680 = vpop.permute.xlu0 %1679
    %1681 = vrot.lane.b32.xlu0 %v1664, 60
    %v1682 = vpop.permute.xlu0 %1681
    %1683 = vrot.lane.b32.xlu0 %v1666, 60
    %v1684 = vpop.permute.xlu0 %1683
    %v1694 = vsel %vm1281, %v1540, %v1577
    %v1695 = vsel %vm1281, %v1541, %v1579
    %v1696 = vsel %vm1281, %v1542, %v1581
    %v1697 = vsel %vm1281, %v1543, %v1583
    %v1698 = vsel %vm1281, %v1544, %v1585
    %v1699 = vsel %vm1281, %v1545, %v1587
    %v1700 = vsel %vm1281, %v1546, %v1589
    %v1701 = vsel %vm1281, %v1547, %v1591
    %v1702 = vsel %vm1281, %v1548, %v1593
    %v1703 = vsel %vm1330, %v1694, %v1621
    %v1704 = vsel %vm1330, %v1695, %v1623
    %v1705 = vsel %vm1330, %v1696, %v1625
    %v1706 = vsel %vm1330, %v1697, %v1627
    %v1707 = vsel %vm1330, %v1698, %v1629
    %v1708 = vsel %vm1330, %v1699, %v1631
    %v1709 = vsel %vm1330, %v1700, %v1633
    %v1710 = vsel %vm1330, %v1701, %v1635
    %v1711 = vsel %vm1330, %v1702, %v1637
    %vm1712 = vcmask 490496
    %v1713 = vsel %vm1712, %v1703, %v1668
    %v1714 = vsel %vm1712, %v1704, %v1670
    %v1715 = vsel %vm1712, %v1705, %v1672
    %v1716 = vsel %vm1712, %v1706, %v1674
    %v1717 = vsel %vm1712, %v1707, %v1676
    %v1718 = vsel %vm1712, %v1708, %v1678
    %v1719 = vsel %vm1712, %v1709, %v1680
    %v1720 = vsel %vm1712, %v1710, %v1682
    %v1721 = vsel %vm1712, %v1711, %v1684
    %v1722 = vld [vmem:[%s5] sm:$0xff]
    %v1723 = vld [vmem:[%s5 + $0x8] sm:$0xff]
    %v1724 = vld [vmem:[%s5 + $0x10] sm:$0xff]
    %v1725 = vld [vmem:[%s5 + $0x18] sm:$0xff]
    %v1726 = vld [vmem:[%s5 + $0x20] sm:$0xff]
    %v1727 = vld [vmem:[%s5 + $0x28] sm:$0xff]
    %v1728 = vld [vmem:[%s5 + $0x30] sm:$0xff]
    %v1729 = vld [vmem:[%s5 + $0x38] sm:$0xff]
    %v1730 = vld [vmem:[%s5 + $0x40] sm:$0xff]
    %v1731 = vld [vmem:[%s5 + $0x48] sm:$0xff]
    %v1732 = vld [vmem:[%s6] sm:$0x1]
    %v1734 = vperm.slane %v1732, 0
    %vm1736 = vcmask 654336
    %v1738 = vsel %vm1736, %v1713, 0
    %v1741 = vsel %vm1736, %v1714, 0
    %v1744 = vsel %vm1736, %v1715, 0
    %v1747 = vsel %vm1736, %v1716, 0
    %v1750 = vsel %vm1736, %v1717, 0
    %v1753 = vsel %vm1736, %v1718, 0
    %v1756 = vsel %vm1736, %v1719, 0
    %v1759 = vsel %vm1736, %v1720, 0
    %v1762 = vsel %vm1736, %v1721, 0
    %1764 = vmatpush.msra.mxu0 0.0
    %1765 = vmatpush.msra.mxu0 0.0
    %1766 = vmatpush.msra.mxu0 0.0
    %1767 = vmatpush.msra.mxu0 0.0
    %1768 = vmatpush.msra.mxu0 0.0
    %1769 = vmatpush.msra.mxu0 0.0
    %1770 = vmatpush.msra.mxu0 %v1731
    %1771 = vmatpush.msra.mxu0 %v1730
    %1772 = vmatpush.msra.mxu0 %v1729
    %1773 = vmatpush.msra.mxu0 %v1728
    %1774 = vmatpush.msra.mxu0 %v1727
    %1775 = vmatpush.msra.mxu0 %v1726
    %1776 = vmatpush.msra.mxu0 %v1725
    %1777 = vmatpush.msra.mxu0 %v1724
    %1778 = vmatpush.msra.mxu0 %v1723
    %1779 = vmatpush.msra.mxu0 %v1722
    %1780 = vmatmul.f32.gmra.mxu0 %v1738
    %v1781 = vpop.f32.mrf.mxu0
    %v1782 = vadd.f32 %v1734, %v1781
    %1783 = vmatmul.f32.gmra.mxu0 %v1741
    %v1784 = vpop.f32.mrf.mxu0
    %v1785 = vadd.f32 %v1734, %v1784
    %1786 = vmatmul.f32.gmra.mxu0 %v1744
    %v1787 = vpop.f32.mrf.mxu0
    %v1788 = vadd.f32 %v1734, %v1787
    %1789 = vmatmul.f32.gmra.mxu0 %v1747
    %v1790 = vpop.f32.mrf.mxu0
    %v1791 = vadd.f32 %v1734, %v1790
    %1792 = vmatmul.f32.gmra.mxu0 %v1750
    %v1793 = vpop.f32.mrf.mxu0
    %v1794 = vadd.f32 %v1734, %v1793
    %1795 = vmatmul.f32.gmra.mxu0 %v1753
    %v1796 = vpop.f32.mrf.mxu0
    %v1797 = vadd.f32 %v1734, %v1796
    %1798 = vmatmul.f32.gmra.mxu0 %v1756
    %v1799 = vpop.f32.mrf.mxu0
    %v1800 = vadd.f32 %v1734, %v1799
    %1801 = vmatmul.f32.gmra.mxu0 %v1759
    %v1802 = vpop.f32.mrf.mxu0
    %v1803 = vadd.f32 %v1734, %v1802
    %1804 = vmatmul.f32.gmra.mxu0 %v1762
    %v1805 = vpop.f32.mrf.mxu0
    %v1806 = vadd.f32 %v1734, %v1805
    %1807 = vdwg.mxu0
    %1808 = vst.msk [vmem:[#allocation4] sm:$0xff] %vm1330, %v1782
    %1809 = vst.msk [vmem:[#allocation4 + $0x8] sm:$0xff] %vm1330, %v1785
    %1810 = vst.msk [vmem:[#allocation4 + $0x10] sm:$0xff] %vm1330, %v1788
    %1811 = vst.msk [vmem:[#allocation4 + $0x18] sm:$0xff] %vm1330, %v1791
    %1812 = vst.msk [vmem:[#allocation4 + $0x20] sm:$0xff] %vm1330, %v1794
    %1813 = vst.msk [vmem:[#allocation4 + $0x28] sm:$0xff] %vm1330, %v1797
    %1814 = vst.msk [vmem:[#allocation4 + $0x30] sm:$0xff] %vm1330, %v1800
    %1815 = vst.msk [vmem:[#allocation4 + $0x38] sm:$0xff] %vm1330, %v1803
    %vm1816 = vcmask 324608
    %1817 = vst.msk [vmem:[#allocation4 + $0x40] sm:$0x3f] %vm1816, %v1806
    %v1818 = vld [vmem:[#allocation4] ss:$2 sm:$0xff]
    %s1819 = scalar_lea.vmem [#allocation4], 16
    %v1820 = vld [vmem:[%s1819] ss:$2 sm:$0xff]
    %s1821 = scalar_lea.vmem [#allocation4], 32
    %v1822 = vld [vmem:[%s1821] ss:$2 sm:$0xff]
    %s1823 = scalar_lea.vmem [#allocation4], 48
    %v1824 = vld [vmem:[%s1823] ss:$2 sm:$0xff]
    %s1825 = scalar_lea.vmem [#allocation4], 64
    %v1826 = vld [vmem:[%s1825] ss:$2 sm:$0x7]
    %s1827 = scalar_lea.vmem [#allocation4], 1
    %v1828 = vld [vmem:[%s1827] ss:$2 sm:$0xff]
    %s1829 = scalar_lea.vmem [#allocation4], 17
    %v1830 = vld [vmem:[%s1829] ss:$2 sm:$0xff]
    %s1831 = scalar_lea.vmem [#allocation4], 33
    %v1832 = vld [vmem:[%s1831] ss:$2 sm:$0xff]
    %s1833 = scalar_lea.vmem [#allocation4], 49
    %v1834 = vld [vmem:[%s1833] ss:$2 sm:$0xff]
    %s1835 = scalar_lea.vmem [#allocation4], 65
    %v1836 = vld [vmem:[%s1835] ss:$2 sm:$0x7]
    %v1837 = vmax.f32 %v1818, %v1828
    %v1838 = vmax.f32 %v1820, %v1830
    %v1839 = vmax.f32 %v1822, %v1832
    %v1840 = vmax.f32 %v1824, %v1834
    %v1841 = vmax.f32 %v1826, %v1836
    %1847 = vrot.lane.b32.xlu0 %v1837, 40
    %v1848 = vpop.permute.xlu0 %1847
    %1849 = vrot.lane.b32.xlu0 %v1838, 40
    %v1850 = vpop.permute.xlu0 %1849
    %1851 = vrot.lane.b32.xlu0 %v1839, 40
    %v1852 = vpop.permute.xlu0 %1851
    %1853 = vrot.lane.b32.xlu0 %v1840, 40
    %v1854 = vpop.permute.xlu0 %1853
    %1855 = vrot.lane.b32.xlu0 %v1841, 40
    %v1856 = vpop.permute.xlu0 %1855
    %1862 = vrot.lane.b32.xlu0 %v1837, 80
    %v1863 = vpop.permute.xlu0 %1862
    %1864 = vrot.lane.b32.xlu0 %v1838, 80
    %v1865 = vpop.permute.xlu0 %1864
    %1866 = vrot.lane.b32.xlu0 %v1839, 80
    %v1867 = vpop.permute.xlu0 %1866
    %1868 = vrot.lane.b32.xlu0 %v1840, 80
    %v1869 = vpop.permute.xlu0 %1868
    %1870 = vrot.lane.b32.xlu0 %v1841, 80
    %v1871 = vpop.permute.xlu0 %1870
    %1877 = vrot.lane.b32.xlu0 %v1837, 120
    %v1878 = vpop.permute.xlu0 %1877
    %1879 = vrot.lane.b32.xlu0 %v1838, 120
    %v1880 = vpop.permute.xlu0 %1879
    %1881 = vrot.lane.b32.xlu0 %v1839, 120
    %v1882 = vpop.permute.xlu0 %1881
    %1883 = vrot.lane.b32.xlu0 %v1840, 120
    %v1884 = vpop.permute.xlu0 %1883
    %1885 = vrot.lane.b32.xlu0 %v1841, 120
    %v1886 = vpop.permute.xlu0 %1885
    %1892 = vrot.lane.b32.xlu0 %v1837, 32
    %v1893 = vpop.permute.xlu0 %1892
    %1894 = vrot.lane.b32.xlu0 %v1838, 32
    %v1895 = vpop.permute.xlu0 %1894
    %1896 = vrot.lane.b32.xlu0 %v1839, 32
    %v1897 = vpop.permute.xlu0 %1896
    %1898 = vrot.lane.b32.xlu0 %v1840, 32
    %v1899 = vpop.permute.xlu0 %1898
    %1900 = vrot.lane.b32.xlu0 %v1841, 32
    %v1901 = vpop.permute.xlu0 %1900
    %v1907 = vsel %vm1330, %v1837, %v1848
    %v1908 = vsel %vm1330, %v1838, %v1850
    %v1909 = vsel %vm1330, %v1839, %v1852
    %v1910 = vsel %vm1330, %v1840, %v1854
    %v1911 = vsel %vm1330, %v1841, %v1856
    %v1912 = vsel %vm1736, %v1907, %v1863
    %v1913 = vsel %vm1736, %v1908, %v1865
    %v1914 = vsel %vm1736, %v1909, %v1867
    %v1915 = vsel %vm1736, %v1910, %v1869
    %v1916 = vsel %vm1736, %v1911, %v1871
    %vm1917 = vcmask 982016
    %v1918 = vsel %vm1917, %v1912, %v1878
    %v1919 = vsel %vm1917, %v1913, %v1880
    %v1920 = vsel %vm1917, %v1914, %v1882
    %v1921 = vsel %vm1917, %v1915, %v1884
    %v1922 = vsel %vm1917, %v1916, %v1886
    %vm1923 = vcmask 261120
    %v1924 = vsel %vm1923, %v1878, %v1893
    %v1925 = vsel %vm1923, %v1880, %v1895
    %v1926 = vsel %vm1923, %v1882, %v1897
    %v1927 = vsel %vm1923, %v1884, %v1899
    %v1928 = vsel %vm1923, %v1886, %v1901
    %v1929 = vld [vmem:[%s7] sm:$0xff]
    %v1930 = vld [vmem:[%s7 + $0x8] sm:$0xff]
    %v1931 = vld [vmem:[%s7 + $0x10] sm:$0xff]
    %v1932 = vld [vmem:[%s7 + $0x18] sm:$0xff]
    %v1933 = vld [vmem:[%s7 + $0x20] sm:$0xff]
    %v1934 = vld [vmem:[%s7 + $0x28] sm:$0xff]
    %v1935 = vld [vmem:[%s7 + $0x30] sm:$0xff]
    %v1936 = vld [vmem:[%s7 + $0x38] sm:$0xff]
    %v1937 = vld [vmem:[%s7 + $0x40] sm:$0x7]
    %v1938 = vld [vmem:[%s7 + $0x48] sm:$0x7]
    %v1939 = vmul.f32 %v1918, %v1929
    %v1940 = vmul.f32 %v1924, %v1930
    %v1941 = vmul.f32 %v1919, %v1931
    %v1942 = vmul.f32 %v1925, %v1932
    %v1943 = vmul.f32 %v1920, %v1933
    %v1944 = vmul.f32 %v1926, %v1934
    %v1945 = vmul.f32 %v1921, %v1935
    %v1946 = vmul.f32 %v1927, %v1936
    %v1947 = vmul.f32 %v1922, %v1937
    %v1948 = vmul.f32 %v1928, %v1938
    %v1949 = vadd.f32 %v1939, %v1941
    %v1950 = vadd.f32 %v1949, %v1943
    %v1951 = vadd.f32 %v1950, %v1945
    %vm1952 = vcmask 1042432
    %v1953 = vsel %vm1952, %v1947, 0.0
    %v1954 = vadd.f32 %v1951, %v1953
    %v1955 = vrot.slane %v1954, 4
    %v1956 = vadd.f32 %v1954, %v1955
    %v1957 = vrot.slane %v1956, 2
    %v1958 = vadd.f32 %v1956, %v1957
    %v1959 = vrot.slane %v1958, 1
    %v1960 = vadd.f32 %v1958, %v1959
    %vm1961 = vcmask 588800
    %v1962 = vsel %vm1961, %v1940, 0.0
    %v1963 = vsel %vm1961, %v1942, 0.0
    %v1964 = vadd.f32 %v1962, %v1963
    %v1965 = vsel %vm1961, %v1944, 0.0
    %v1966 = vadd.f32 %v1964, %v1965
    %v1967 = vsel %vm1961, %v1946, 0.0
    %v1968 = vadd.f32 %v1966, %v1967
    %vm1969 = vcmask 583680
    %v1970 = vsel %vm1969, %v1948, 0.0
    %v1971 = vadd.f32 %v1968, %v1970
    %v1972 = vrot.slane %v1971, 4
    %v1973 = vadd.f32 %v1971, %v1972
    %v1974 = vrot.slane %v1973, 2
    %v1975 = vadd.f32 %v1973, %v1974
    %v1976 = vrot.slane %v1975, 1
    %v1977 = vadd.f32 %v1975, %v1976
    %v1978 = vld [vmem:[%s8] sm:$0xff]
    %v1979 = vld [vmem:[%s8 + $0x8] sm:$0xff]
    %v1980 = vld [vmem:[%s8 + $0x10] sm:$0xff]
    %v1981 = vld [vmem:[%s8 + $0x18] sm:$0xff]
    %v1982 = vld [vmem:[%s8 + $0x20] sm:$0xff]
    %v1983 = vld [vmem:[%s8 + $0x28] sm:$0xff]
    %v1984 = vld [vmem:[%s8 + $0x30] sm:$0xff]
    %v1985 = vld [vmem:[%s8 + $0x38] sm:$0xff]
    %v1986 = vld [vmem:[%s8 + $0x40] sm:$0xff]
    %v1987 = vld [vmem:[%s8 + $0x48] sm:$0xff]
    %v1988 = vld [vmem:[%s8 + $0x50] sm:$0xff]
    %v1989 = vld [vmem:[%s8 + $0x58] sm:$0xff]
    %v1990 = vld [vmem:[%s8 + $0x60] sm:$0xff]
    %v1991 = vld [vmem:[%s8 + $0x68] sm:$0xff]
    %v1992 = vld [vmem:[%s8 + $0x70] sm:$0xff]
    %v1993 = vld [vmem:[%s8 + $0x78] sm:$0xff]
    %v1994 = vld [vmem:[%s8 + $0x80] sm:$0xff]
    %v1995 = vld [vmem:[%s8 + $0x88] sm:$0xff]
    %v1996 = vld [vmem:[%s8 + $0x90] sm:$0xff]
    %v1997 = vld [vmem:[%s8 + $0x98] sm:$0xff]
    %v1998 = vld [vmem:[%s8 + $0xa0] sm:$0xff]
    %v1999 = vld [vmem:[%s8 + $0xa8] sm:$0xff]
    %v2000 = vld [vmem:[%s8 + $0xb0] sm:$0xff]
    %v2001 = vld [vmem:[%s8 + $0xb8] sm:$0xff]
    %v2002 = vld [vmem:[%s8 + $0xc0] sm:$0xff]
    %v2003 = vld [vmem:[%s9] sm:$0x1]
    %v2005 = vsel %vm1961, %v1977, 0
    %2007 = vmatpush.msra.mxu0 %v1993
    %2008 = vmatpush.msra.mxu0 %v1992
    %2009 = vmatpush.msra.mxu0 %v1991
    %2010 = vmatpush.msra.mxu0 %v1990
    %2011 = vmatpush.msra.mxu0 %v1989
    %2012 = vmatpush.msra.mxu0 %v1988
    %2013 = vmatpush.msra.mxu0 %v1987
    %2014 = vmatpush.msra.mxu0 %v1986
    %2015 = vmatpush.msra.mxu0 %v1985
    %2016 = vmatpush.msra.mxu0 %v1984
    %2017 = vmatpush.msra.mxu0 %v1983
    %2018 = vmatpush.msra.mxu0 %v1982
    %2019 = vmatpush.msra.mxu0 %v1981
    %2020 = vmatpush.msra.mxu0 %v1980
    %2021 = vmatpush.msra.mxu0 %v1979
    %2022 = vmatpush.msra.mxu0 %v1978
    %2023 = vmatmul.f32.gmra.mxu0 %v1960
    %v2024 = vpop.f32.mrf.mxu0
    %v2025 = vadd.f32 %v2003, %v2024
    %2026 = vdwg.mxu0
    %2027 = vmatpush.msra.mxu0 0.0
    %2028 = vmatpush.msra.mxu0 0.0
    %2029 = vmatpush.msra.mxu0 0.0
    %2030 = vmatpush.msra.mxu0 0.0
    %2031 = vmatpush.msra.mxu0 0.0
    %2032 = vmatpush.msra.mxu0 0.0
    %2033 = vmatpush.msra.mxu0 0.0
    %2034 = vmatpush.msra.mxu0 %v2002
    %2035 = vmatpush.msra.mxu0 %v2001
    %2036 = vmatpush.msra.mxu0 %v2000
    %2037 = vmatpush.msra.mxu0 %v1999
    %2038 = vmatpush.msra.mxu0 %v1998
    %2039 = vmatpush.msra.mxu0 %v1997
    %2040 = vmatpush.msra.mxu0 %v1996
    %2041 = vmatpush.msra.mxu0 %v1995
    %2042 = vmatpush.msra.mxu0 %v1994
    %2043 = vmatmul.f32.gmra.mxu0 %v2005
    %v2044 = vpop.f32.mrf.mxu0
    %v2045 = vadd.f32 %v2025, %v2044
    %2046 = vdwg.mxu0
    %s2047 = scalar_lea.vmem %s8, 200
    %v2048 = vld [vmem:[%s2047] sm:$0xff]
    %v2049 = vld [vmem:[%s2047 + $0x8] sm:$0xff]
    %v2050 = vld [vmem:[%s2047 + $0x10] sm:$0xff]
    %v2051 = vld [vmem:[%s2047 + $0x18] sm:$0xff]
    %v2052 = vld [vmem:[%s2047 + $0x20] sm:$0xff]
    %v2053 = vld [vmem:[%s2047 + $0x28] sm:$0xff]
    %v2054 = vld [vmem:[%s2047 + $0x30] sm:$0xff]
    %v2055 = vld [vmem:[%s2047 + $0x38] sm:$0xff]
    %v2056 = vld [vmem:[%s2047 + $0x40] sm:$0xff]
    %v2057 = vld [vmem:[%s2047 + $0x48] sm:$0xff]
    %v2058 = vld [vmem:[%s2047 + $0x50] sm:$0xff]
    %v2059 = vld [vmem:[%s2047 + $0x58] sm:$0xff]
    %v2060 = vld [vmem:[%s2047 + $0x60] sm:$0xff]
    %v2061 = vld [vmem:[%s2047 + $0x68] sm:$0xff]
    %v2062 = vld [vmem:[%s2047 + $0x70] sm:$0xff]
    %v2063 = vld [vmem:[%s2047 + $0x78] sm:$0xff]
    %v2064 = vld [vmem:[%s2047 + $0x80] sm:$0xff]
    %v2065 = vld [vmem:[%s2047 + $0x88] sm:$0xff]
    %v2066 = vld [vmem:[%s2047 + $0x90] sm:$0xff]
    %v2067 = vld [vmem:[%s2047 + $0x98] sm:$0xff]
    %v2068 = vld [vmem:[%s2047 + $0xa0] sm:$0xff]
    %v2069 = vld [vmem:[%s2047 + $0xa8] sm:$0xff]
    %v2070 = vld [vmem:[%s2047 + $0xb0] sm:$0xff]
    %v2071 = vld [vmem:[%s2047 + $0xb8] sm:$0xff]
    %v2072 = vld [vmem:[%s2047 + $0xc0] sm:$0xff]
    %2073 = vmatpush.msra.mxu0 %v2063
    %2074 = vmatpush.msra.mxu0 %v2062
    %2075 = vmatpush.msra.mxu0 %v2061
    %2076 = vmatpush.msra.mxu0 %v2060
    %2077 = vmatpush.msra.mxu0 %v2059
    %2078 = vmatpush.msra.mxu0 %v2058
    %2079 = vmatpush.msra.mxu0 %v2057
    %2080 = vmatpush.msra.mxu0 %v2056
    %2081 = vmatpush.msra.mxu0 %v2055
    %2082 = vmatpush.msra.mxu0 %v2054
    %2083 = vmatpush.msra.mxu0 %v2053
    %2084 = vmatpush.msra.mxu0 %v2052
    %2085 = vmatpush.msra.mxu0 %v2051
    %2086 = vmatpush.msra.mxu0 %v2050
    %2087 = vmatpush.msra.mxu0 %v2049
    %2088 = vmatpush.msra.mxu0 %v2048
    %2089 = vmatmul.f32.gmra.mxu0 %v1960
    %v2090 = vpop.f32.mrf.mxu0
    %v2091 = vadd.f32 %v2003, %v2090
    %2092 = vdwg.mxu0
    %2093 = vmatpush.msra.mxu0 0.0
    %2094 = vmatpush.msra.mxu0 0.0
    %2095 = vmatpush.msra.mxu0 0.0
    %2096 = vmatpush.msra.mxu0 0.0
    %2097 = vmatpush.msra.mxu0 0.0
    %2098 = vmatpush.msra.mxu0 0.0
    %2099 = vmatpush.msra.mxu0 0.0
    %2100 = vmatpush.msra.mxu0 %v2072
    %2101 = vmatpush.msra.mxu0 %v2071
    %2102 = vmatpush.msra.mxu0 %v2070
    %2103 = vmatpush.msra.mxu0 %v2069
    %2104 = vmatpush.msra.mxu0 %v2068
    %2105 = vmatpush.msra.mxu0 %v2067
    %2106 = vmatpush.msra.mxu0 %v2066
    %2107 = vmatpush.msra.mxu0 %v2065
    %2108 = vmatpush.msra.mxu0 %v2064
    %2109 = vmatmul.f32.gmra.mxu0 %v2005
    %v2110 = vpop.f32.mrf.mxu0
    %v2111 = vadd.f32 %v2091, %v2110
    %2112 = vdwg.mxu0
    %v2114 = vrot.slane %v2111, 7
    %vm2116 = vcmask 1040384
    %v2117 = vsel %vm2116, %v2045, %v2114
    %vm2118 = vcmask 33792
    %2119 = vst.msk [vmem:[#allocation5] sm:$0x3] %vm2118, %v2117
    // Predicated region
    $region42: #{classification_forward.1} parent=1 // pred_check
      _
    $region43: #{classification_forward.1} parent=1 // pred_check_branch
      %2121 = sbr.rel (0) target = $region45
    $region44: #{classification_forward.1} parent=1 // pred_region
      %2123 = vsyncadd [#allocation6], 0
      %s2125 = sshll.u32 [#allocation5], 4
      %s2126 = int_to_ptr.vmem [resolvable:$true] %s2125
      %s2127 = sshll.u32 %s10, 4
      %s2128 = int_to_ptr.hbm [resolvable:$true] %s2127
      %2130 = dma.vmem_to_hbm [thread:$0]  %s2126, 32, %s2128, [#allocation6]
    $region45: #{classification_forward.1} parent=1 // pred_fallthru
      _
    // Predicated region
    $region46: #{classification_forward.1} parent=1 // pred_check
      _
    $region47: #{classification_forward.1} parent=1 // pred_check_branch
      %2132 = sbr.rel (0) target = $region49
    $region48: #{classification_forward.1} parent=1 // pred_region
      %2134 = dma.done [#allocation6], 32
    $region49: #{classification_forward.1} parent=1 // pred_fallthru
      _
    %2135 = vsyncpa [#allocation6], 1

</llo_original>
